<compile_context>
chip_gen: v5e
topology: v5e:2x2
jax: 0.10.0
libtpu: 0.0.40
codegen_flags: <defaults>
</compile_context>

<pallas_src>
import functools

import jax
import jax.numpy as jnp
from jax.experimental import pallas as pl
from jax.experimental.pallas import tpu as pltpu


# ----------------------------------------------------------------------------
# Fused kernel: one grid step == one batch element b.
# ----------------------------------------------------------------------------
def temporal_gnn_kernel(a_ref, x_ref,
                        w1_ref, b1_ref, w2_ref, b2_ref,
                        wih_ref, whh_ref, bl_ref, wp_ref, bp_ref,
                        o_ref, xw_scr):
    tn = a_ref.shape[1]                 # T*N
    h_dim = b1_ref.shape[-1]            # H
    t_len = xw_scr.shape[0]             # T   (LSTM sequence length)
    n_seq = xw_scr.shape[1]             # N   (sequences per batch element)

    a = a_ref[0]                        # [TN, TN]  block-diagonal A_hat, bf16
    x2 = x_ref[0]                       # [TN, F]   node features, bf16

    # ---- directed GCN layer: A@ (f Ws') + A^T@ (f Wd') + b' ----------------
    def dir_layer(feat, w_cat_ref, b_ref):
        # feat: [TN, Din] bf16. w_cat = [Ws' | Wd'] (alpha folded in).
        proj = jnp.dot(feat, w_cat_ref[...],
                       preferred_element_type=jnp.float32)        # [TN, 2H]
        fs = proj[:, :h_dim].astype(jnp.bfloat16)
        fd = proj[:, h_dim:].astype(jnp.bfloat16)
        # A @ fs : one K = TN matmul (block-diag => per-graph aggregation)
        agg_s = jnp.dot(a, fs, preferred_element_type=jnp.float32)
        # A^T @ fd : contract A's first axis, A^T never materialized
        agg_d = jax.lax.dot_general(a, fd, (((0,), (0,)), ((), ())),
                                    preferred_element_type=jnp.float32)
        return agg_s + agg_d + b_ref[...]                          # [TN, H] f32

    h1 = dir_layer(x2, w1_ref, b1_ref)
    h2 = dir_layer(h1.astype(jnp.bfloat16), w2_ref, b2_ref)        # [TN, H] f32

    # ---- LSTM: input projection for every timestep hoisted into one matmul --
    xw = (jnp.dot(h2.astype(jnp.bfloat16), wih_ref[...],
                  preferred_element_type=jnp.float32)
          + bl_ref[...])                                           # [TN, 4H] f32
    # torch raw-reshape semantics: [TN, 4H] == [N_seq, T, 4H] row-major.
    # Go time-major ONCE (pure tile permutation: dims (16, 8, 128) -> (8, 16, 128))
    # so each recurrence step reads a contiguous [N_seq, 4H] slab.
    xw_scr[...] = jnp.transpose(xw.reshape(n_seq, t_len, 4 * h_dim), (1, 0, 2))

    whh = whh_ref[...]                                             # [H, 4H] bf16

    def step(t, carry):
        h, c = carry
        gates = xw_scr[t] + jnp.dot(h.astype(jnp.bfloat16), whh,
                                    preferred_element_type=jnp.float32)
        # gate column order (i, f, o, g): one 3H-wide sigmoid + one H-wide tanh
        sig = jax.nn.sigmoid(gates[:, :3 * h_dim])
        g_g = jnp.tanh(gates[:, 3 * h_dim:])
        i_g = sig[:, :h_dim]
        f_g = sig[:, h_dim:2 * h_dim]
        o_g = sig[:, 2 * h_dim:3 * h_dim]
        c = f_g * c + i_g * g_g
        h = o_g * jnp.tanh(c)
        return h, c

    h0 = jnp.zeros((n_seq, h_dim), jnp.float32)
    c0 = jnp.zeros((n_seq, h_dim), jnp.float32)
    h_last, _ = jax.lax.fori_loop(0, t_len, step, (h0, c0), unroll=True)

    # ---- predictor on the last hidden state --------------------------------
    o_ref[0] = (jnp.dot(h_last.astype(jnp.bfloat16), wp_ref[...],
                        preferred_element_type=jnp.float32) + bp_ref[...])


def run_temporal_gnn(a_blk, x_flat, params, *, seq_len, num_nodes):
    B, TN, _ = a_blk.shape
    F = x_flat.shape[-1]
    H = params["b1"].shape[-1]
    T, N = seq_len, num_nodes
    assert TN == T * N

    def const(shape):
        return pl.BlockSpec(shape, lambda b: (0,) * len(shape))

    return pl.pallas_call(
        temporal_gnn_kernel,
        out_shape=jax.ShapeDtypeStruct((B, N, F), jnp.float32),
        grid=(B,),
        in_specs=[
            pl.BlockSpec((1, TN, TN), lambda b: (b, 0, 0)),   # block-diag A_hat
            pl.BlockSpec((1, TN, F), lambda b: (b, 0, 0)),    # node features
            const((F, 2 * H)), const((1, H)),                 # GNN layer 1
            const((H, 2 * H)), const((1, H)),                 # GNN layer 2
            const((H, 4 * H)), const((H, 4 * H)),             # W_ih^T, W_hh^T
            const((1, 4 * H)),                                # LSTM bias (combined)
            const((H, F)), const((1, F)),                     # predictor
        ],
        out_specs=pl.BlockSpec((1, N, F), lambda b: (b, 0, 0)),
        scratch_shapes=[pltpu.VMEM((T, N, 4 * H), jnp.float32)],
        compiler_params=pltpu.CompilerParams(
            dimension_semantics=("parallel",)),   # v7x: one batch per TensorCore
    )(a_blk, x_flat,
      params["w1"], params["b1"], params["w2"], params["b2"],
      params["wih"], params["whh"], params["bl"],
      params["wp"], params["bp"])


# ----------------------------------------------------------------------------
# Glue (plain JAX, data-dependent scatter): dense normalized adjacency.
# ----------------------------------------------------------------------------
def build_norm_adj(src, dst, w, *, num_nodes):
    adj = jnp.zeros((num_nodes, num_nodes), jnp.float32).at[src, dst].add(w)
    d_out = adj.sum(axis=1)
    d_in = adj.sum(axis=0)
    dos = jnp.where(d_out > 0, jax.lax.rsqrt(d_out), 0.0)
    dis = jnp.where(d_in > 0, jax.lax.rsqrt(d_in), 0.0)
    return dos[:, None] * adj * dis[None, :]      # D_out^-1/2 A D_in^-1/2


def linear_init(key, fan_in, fan_out):
    k1, k2 = jax.random.split(key)
    bound = 1.0 / (fan_in ** 0.5)
    w = jax.random.uniform(k1, (fan_in, fan_out), jnp.float32, -bound, bound)
    b = jax.random.uniform(k2, (1, fan_out), jnp.float32, -bound, bound)
    return w, b


def reorder_ifgo_to_ifog(w):
    # PyTorch LSTM gate order (i, f, g, o) -> kernel order (i, f, o, g) so the
    # sigmoid covers one contiguous 3H-lane slice.
    i, f, g, o = jnp.split(w, 4, axis=-1)
    return jnp.concatenate([i, f, o, g], axis=-1)


if __name__ == "__main__":
    # small shapes consistent with the module
    B, T, N, F, H = 2, 8, 16, 4, 32   # batch, seq_len, num_nodes, features, hidden
    E = 48                            # edges per graph
    ALPHA = 0.5                       # default alpha, learn_alpha=False

    key = jax.random.PRNGKey(0)
    k_x, k_e, k_gnn, k_lstm, k_pred = jax.random.split(key, 5)

    # ---- inputs ----
    x_seq = jax.random.normal(k_x, (B, T, N, F), jnp.float32)
    ke1, ke2, ke3 = jax.random.split(k_e, 3)
    src = jax.random.randint(ke1, (B, T, E), 0, N)            # edge_index[...,0,:]
    dst = jax.random.randint(ke2, (B, T, E), 0, N)            # edge_index[...,1,:]
    ew = jax.random.uniform(ke3, (B, T, E), jnp.float32, 0.5, 1.5)

    # ---- GNN parameters (alpha folded in, Ws|Wd concatenated per layer) ----
    kg1, kg2, kg3, kg4 = jax.random.split(k_gnn, 4)
    w1s, b1s = linear_init(kg1, F, H)
    w1d, b1d = linear_init(kg2, F, H)
    w2s, b2s = linear_init(kg3, H, H)
    w2d, b2d = linear_init(kg4, H, H)

    # ---- LSTM / predictor parameters (PyTorch layout, then gate-reordered) --
    kl1, kl2, kl3, kl4 = jax.random.split(k_lstm, 4)
    lbound = 1.0 / (H ** 0.5)
    wih_t = jax.random.uniform(kl1, (H, 4 * H), jnp.float32, -lbound, lbound)  # W_ih^T
    whh_t = jax.random.uniform(kl2, (H, 4 * H), jnp.float32, -lbound, lbound)  # W_hh^T
    b_ih = jax.random.uniform(kl3, (1, 4 * H), jnp.float32, -lbound, lbound)
    b_hh = jax.random.uniform(kl4, (1, 4 * H), jnp.float32, -lbound, lbound)
    wp_t, bp = linear_init(k_pred, H, F)   # predictor: Linear(H, F)

    params = dict(
        w1=jnp.concatenate([ALPHA * w1s, (1.0 - ALPHA) * w1d],
                           axis=1).astype(jnp.bfloat16),            # [F, 2H]
        b1=(ALPHA * b1s + (1.0 - ALPHA) * b1d),                      # [1, H] f32
        w2=jnp.concatenate([ALPHA * w2s, (1.0 - ALPHA) * w2d],
                           axis=1).astype(jnp.bfloat16),             # [H, 2H]
        b2=(ALPHA * b2s + (1.0 - ALPHA) * b2d),                      # [1, H] f32
        wih=reorder_ifgo_to_ifog(wih_t).astype(jnp.bfloat16),        # [H, 4H]
        whh=reorder_ifgo_to_ifog(whh_t).astype(jnp.bfloat16),        # [H, 4H]
        bl=reorder_ifgo_to_ifog(b_ih + b_hh),                        # [1, 4H] f32
        wp=wp_t.astype(jnp.bfloat16),                                # [H, F]
        bp=bp,                                                       # [1, F] f32
    )

    # ---- glue: normalized adjacency per (b, t), assembled block-diagonally --
    build = functools.partial(build_norm_adj, num_nodes=N)
    a_norm = jax.vmap(jax.vmap(build))(src, dst, ew)                 # [B, T, N, N]
    eye_t = jnp.eye(T, dtype=jnp.float32)
    a_blk = jnp.einsum('tu,btnm->btnum', eye_t,
                       a_norm).reshape(B, T * N, T * N).astype(jnp.bfloat16)
    x_flat = x_seq.reshape(B, T * N, F).astype(jnp.bfloat16)

    # ---- fused GNN + LSTM + predictor (single Pallas call) ----
    out = run_temporal_gnn(a_blk, x_flat, params, seq_len=T, num_nodes=N)

    jax.block_until_ready(out)
    assert out.shape == (B, N, F)
    print("KERNEL_OK")
</pallas_src>

<mosaic_0001>
module attributes {stable_mosaic.version = 11 : i64} {
  func.func @temporal_gnn_kernel(%arg0: i32, %arg1: memref<1x128x128xbf16, #tpu.memory_space<vmem>>, %arg2: memref<1x128x4xbf16, #tpu.memory_space<vmem>>, %arg3: memref<4x64xbf16, #tpu.memory_space<vmem>>, %arg4: memref<1x32xf32, #tpu.memory_space<vmem>>, %arg5: memref<32x64xbf16, #tpu.memory_space<vmem>>, %arg6: memref<1x32xf32, #tpu.memory_space<vmem>>, %arg7: memref<32x128xbf16, #tpu.memory_space<vmem>>, %arg8: memref<32x128xbf16, #tpu.memory_space<vmem>>, %arg9: memref<1x128xf32, #tpu.memory_space<vmem>>, %arg10: memref<32x4xbf16, #tpu.memory_space<vmem>>, %arg11: memref<1x4xf32, #tpu.memory_space<vmem>>, %arg12: memref<1x16x4xf32, #tpu.memory_space<vmem>>, %arg13: memref<8x16x128xf32, #tpu.memory_space<vmem>>) attributes {dimension_semantics = [#tpu.dimension_semantics<parallel>], iteration_bounds = array<i64: 2>, scalar_prefetch = 0 : i64, scratch_operands = 1 : i64, tpu.core_type = #tpu.core_type<tc>, window_params = [{transform_indices = @transform_0, window_bounds = array<i64: 1, 128, 128>}, {transform_indices = @transform_1, window_bounds = array<i64: 1, 128, 4>}, {pipeline_mode = #tpu.pipeline_mode<synchronous>, transform_indices = @transform_2, window_bounds = array<i64: 4, 64>}, {pipeline_mode = #tpu.pipeline_mode<synchronous>, transform_indices = @transform_3, window_bounds = array<i64: 1, 32>}, {pipeline_mode = #tpu.pipeline_mode<synchronous>, transform_indices = @transform_4, window_bounds = array<i64: 32, 64>}, {pipeline_mode = #tpu.pipeline_mode<synchronous>, transform_indices = @transform_5, window_bounds = array<i64: 1, 32>}, {pipeline_mode = #tpu.pipeline_mode<synchronous>, transform_indices = @transform_6, window_bounds = array<i64: 32, 128>}, {pipeline_mode = #tpu.pipeline_mode<synchronous>, transform_indices = @transform_7, window_bounds = array<i64: 32, 128>}, {pipeline_mode = #tpu.pipeline_mode<synchronous>, transform_indices = @transform_8, window_bounds = array<i64: 1, 128>}, {pipeline_mode = #tpu.pipeline_mode<synchronous>, transform_indices = @transform_9, window_bounds = array<i64: 32, 4>}, {pipeline_mode = #tpu.pipeline_mode<synchronous>, transform_indices = @transform_10, window_bounds = array<i64: 1, 4>}, {transform_indices = @transform_11, window_bounds = array<i64: 1, 16, 4>}]} {
    %c0 = arith.constant 0 : index
    %c0_0 = arith.constant 0 : index
    %c0_1 = arith.constant 0 : index
    %0 = vector.load %arg1[%c0, %c0_0, %c0_1] : memref<1x128x128xbf16, #tpu.memory_space<vmem>>, vector<1x128x128xbf16>
    %1 = vector.shape_cast %0 : vector<1x128x128xbf16> to vector<128x128xbf16>
    %c0_2 = arith.constant 0 : index
    %c0_3 = arith.constant 0 : index
    %c0_4 = arith.constant 0 : index
    %2 = vector.load %arg2[%c0_2, %c0_3, %c0_4] : memref<1x128x4xbf16, #tpu.memory_space<vmem>>, vector<1x128x4xbf16>
    %3 = vector.shape_cast %2 : vector<1x128x4xbf16> to vector<128x4xbf16>
    %c0_5 = arith.constant 0 : index
    %c0_6 = arith.constant 0 : index
    %4 = vector.load %arg3[%c0_5, %c0_6] : memref<4x64xbf16, #tpu.memory_space<vmem>>, vector<4x64xbf16>
    %cst = arith.constant dense<0.000000e+00> : vector<128x64xf32>
    %5 = tpu.matmul %3, %4, %cst {dimension_numbers = #tpu.dot_dimension_numbers<[1], [0], [0], [1], [0, 0, 1, 1], [], []>} : vector<128x4xbf16>, vector<4x64xbf16>, vector<128x64xf32> -> vector<128x64xf32>
    %6 = vector.extract_strided_slice %5 {offsets = [0, 0], sizes = [128, 32], strides = [1, 1]} : vector<128x64xf32> to vector<128x32xf32>
    %7 = arith.truncf %6 : vector<128x32xf32> to vector<128x32xbf16>
    %8 = vector.extract_strided_slice %5 {offsets = [0, 32], sizes = [128, 32], strides = [1, 1]} : vector<128x64xf32> to vector<128x32xf32>
    %9 = arith.truncf %8 : vector<128x32xf32> to vector<128x32xbf16>
    %cst_7 = arith.constant dense<0.000000e+00> : vector<128x32xf32>
    %10 = tpu.matmul %1, %7, %cst_7 {dimension_numbers = #tpu.dot_dimension_numbers<[1], [0], [0], [1], [0, 0, 1, 1], [], []>} : vector<128x128xbf16>, vector<128x32xbf16>, vector<128x32xf32> -> vector<128x32xf32>
    %cst_8 = arith.constant dense<0.000000e+00> : vector<128x32xf32>
    %11 = tpu.matmul %1, %9, %cst_8 {dimension_numbers = #tpu.dot_dimension_numbers<[0], [0], [1], [1], [0, 1, 1, 1], [], []>} : vector<128x128xbf16>, vector<128x32xbf16>, vector<128x32xf32> -> vector<128x32xf32>
    %12 = arith.addf %10, %11 : vector<128x32xf32>
    %c0_9 = arith.constant 0 : index
    %c0_10 = arith.constant 0 : index
    %13 = vector.load %arg4[%c0_9, %c0_10] : memref<1x32xf32, #tpu.memory_space<vmem>>, vector<1x32xf32>
    %14 = vector.broadcast %13 : vector<1x32xf32> to vector<128x32xf32>
    %15 = arith.addf %12, %14 : vector<128x32xf32>
    %16 = arith.truncf %15 : vector<128x32xf32> to vector<128x32xbf16>
    %c0_11 = arith.constant 0 : index
    %c0_12 = arith.constant 0 : index
    %17 = vector.load %arg5[%c0_11, %c0_12] : memref<32x64xbf16, #tpu.memory_space<vmem>>, vector<32x64xbf16>
    %cst_13 = arith.constant dense<0.000000e+00> : vector<128x64xf32>
    %18 = tpu.matmul %16, %17, %cst_13 {dimension_numbers = #tpu.dot_dimension_numbers<[1], [0], [0], [1], [0, 0, 1, 1], [], []>} : vector<128x32xbf16>, vector<32x64xbf16>, vector<128x64xf32> -> vector<128x64xf32>
    %19 = vector.extract_strided_slice %18 {offsets = [0, 0], sizes = [128, 32], strides = [1, 1]} : vector<128x64xf32> to vector<128x32xf32>
    %20 = arith.truncf %19 : vector<128x32xf32> to vector<128x32xbf16>
    %21 = vector.extract_strided_slice %18 {offsets = [0, 32], sizes = [128, 32], strides = [1, 1]} : vector<128x64xf32> to vector<128x32xf32>
    %22 = arith.truncf %21 : vector<128x32xf32> to vector<128x32xbf16>
    %cst_14 = arith.constant dense<0.000000e+00> : vector<128x32xf32>
    %23 = tpu.matmul %1, %20, %cst_14 {dimension_numbers = #tpu.dot_dimension_numbers<[1], [0], [0], [1], [0, 0, 1, 1], [], []>} : vector<128x128xbf16>, vector<128x32xbf16>, vector<128x32xf32> -> vector<128x32xf32>
    %cst_15 = arith.constant dense<0.000000e+00> : vector<128x32xf32>
    %24 = tpu.matmul %1, %22, %cst_15 {dimension_numbers = #tpu.dot_dimension_numbers<[0], [0], [1], [1], [0, 1, 1, 1], [], []>} : vector<128x128xbf16>, vector<128x32xbf16>, vector<128x32xf32> -> vector<128x32xf32>
    %25 = arith.addf %23, %24 : vector<128x32xf32>
    %c0_16 = arith.constant 0 : index
    %c0_17 = arith.constant 0 : index
    %26 = vector.load %arg6[%c0_16, %c0_17] : memref<1x32xf32, #tpu.memory_space<vmem>>, vector<1x32xf32>
    %27 = vector.broadcast %26 : vector<1x32xf32> to vector<128x32xf32>
    %28 = arith.addf %25, %27 : vector<128x32xf32>
    %29 = arith.truncf %28 : vector<128x32xf32> to vector<128x32xbf16>
    %c0_18 = arith.constant 0 : index
    %c0_19 = arith.constant 0 : index
    %30 = vector.load %arg7[%c0_18, %c0_19] : memref<32x128xbf16, #tpu.memory_space<vmem>>, vector<32x128xbf16>
    %cst_20 = arith.constant dense<0.000000e+00> : vector<128x128xf32>
    %31 = tpu.matmul %29, %30, %cst_20 {dimension_numbers = #tpu.dot_dimension_numbers<[1], [0], [0], [1], [0, 0, 1, 1], [], []>} : vector<128x32xbf16>, vector<32x128xbf16>, vector<128x128xf32> -> vector<128x128xf32>
    %c0_21 = arith.constant 0 : index
    %c0_22 = arith.constant 0 : index
    %32 = vector.load %arg9[%c0_21, %c0_22] : memref<1x128xf32, #tpu.memory_space<vmem>>, vector<1x128xf32>
    %33 = vector.broadcast %32 : vector<1x128xf32> to vector<128x128xf32>
    %34 = arith.addf %31, %33 : vector<128x128xf32>
    %35 = vector.shape_cast %34 : vector<128x128xf32> to vector<16x8x128xf32>
    %36 = tpu.transpose %35, [1, 0, 2] : vector<16x8x128xf32> -> vector<8x16x128xf32>
    %c0_23 = arith.constant 0 : index
    %c0_24 = arith.constant 0 : index
    %c0_25 = arith.constant 0 : index
    %37 = vector.load %arg13[%c0_23, %c0_24, %c0_25] : memref<8x16x128xf32, #tpu.memory_space<vmem>>, vector<8x16x128xf32>
    tpu.vector_store %arg13[%c0_23, %c0_24, %c0_25], %36 {strides = array<i32>} : memref<8x16x128xf32, #tpu.memory_space<vmem>>, vector<8x16x128xf32>,
    %c0_26 = arith.constant 0 : index
    %c0_27 = arith.constant 0 : index
    %38 = vector.load %arg8[%c0_26, %c0_27] : memref<32x128xbf16, #tpu.memory_space<vmem>>, vector<32x128xbf16>
    %cst_28 = arith.constant 0.000000e+00 : f32
    %39 = vector.broadcast %cst_28 : f32 to vector<16x32xf32>
    %cst_29 = arith.constant 0.000000e+00 : f32
    %40 = vector.broadcast %cst_29 : f32 to vector<16x32xf32>
    %c0_i32 = arith.constant 0 : i32
    %41 = arith.index_cast %c0_i32 : i32 to index
    %c0_30 = arith.constant 0 : index
    %c0_31 = arith.constant 0 : index
    %42 = vector.load %arg13[%41, %c0_30, %c0_31] : memref<8x16x128xf32, #tpu.memory_space<vmem>>, vector<1x16x128xf32>
    %43 = vector.shape_cast %42 : vector<1x16x128xf32> to vector<16x128xf32>
    %44 = arith.truncf %39 : vector<16x32xf32> to vector<16x32xbf16>
    %cst_32 = arith.constant dense<0.000000e+00> : vector<16x128xf32>
    %45 = tpu.matmul %44, %38, %cst_32 {dimension_numbers = #tpu.dot_dimension_numbers<[1], [0], [0], [1], [0, 0, 1, 1], [], []>} : vector<16x32xbf16>, vector<32x128xbf16>, vector<16x128xf32> -> vector<16x128xf32>
    %46 = arith.addf %43, %45 : vector<16x128xf32>
    %47 = vector.extract_strided_slice %46 {offsets = [0, 0], sizes = [16, 96], strides = [1, 1]} : vector<16x128xf32> to vector<16x96xf32>
    %48 = arith.negf %47 : vector<16x96xf32>
    %49 = math.exp %48 : vector<16x96xf32>
    %cst_33 = arith.constant 1.000000e+00 : f32
    %50 = vector.broadcast %cst_33 : f32 to vector<16x96xf32>
    %51 = arith.addf %50, %49 : vector<16x96xf32>
    %52 = arith.divf %50, %51 : vector<16x96xf32>
    %53 = vector.extract_strided_slice %46 {offsets = [0, 96], sizes = [16, 32], strides = [1, 1]} : vector<16x128xf32> to vector<16x32xf32>
    %54 = math.tanh %53 : vector<16x32xf32>
    %55 = vector.extract_strided_slice %52 {offsets = [0, 0], sizes = [16, 32], strides = [1, 1]} : vector<16x96xf32> to vector<16x32xf32>
    %56 = vector.extract_strided_slice %52 {offsets = [0, 32], sizes = [16, 32], strides = [1, 1]} : vector<16x96xf32> to vector<16x32xf32>
    %57 = vector.extract_strided_slice %52 {offsets = [0, 64], sizes = [16, 32], strides = [1, 1]} : vector<16x96xf32> to vector<16x32xf32>
    %58 = arith.mulf %56, %40 : vector<16x32xf32>
    %59 = arith.mulf %55, %54 : vector<16x32xf32>
    %60 = arith.addf %58, %59 : vector<16x32xf32>
    %61 = math.tanh %60 : vector<16x32xf32>
    %62 = arith.mulf %57, %61 : vector<16x32xf32>
    %c1_i32 = arith.constant 1 : i32
    %63 = arith.index_cast %c1_i32 : i32 to index
    %c0_34 = arith.constant 0 : index
    %c0_35 = arith.constant 0 : index
    %64 = vector.load %arg13[%63, %c0_34, %c0_35] : memref<8x16x128xf32, #tpu.memory_space<vmem>>, vector<1x16x128xf32>
    %65 = vector.shape_cast %64 : vector<1x16x128xf32> to vector<16x128xf32>
    %66 = arith.truncf %62 : vector<16x32xf32> to vector<16x32xbf16>
    %cst_36 = arith.constant dense<0.000000e+00> : vector<16x128xf32>
    %67 = tpu.matmul %66, %38, %cst_36 {dimension_numbers = #tpu.dot_dimension_numbers<[1], [0], [0], [1], [0, 0, 1, 1], [], []>} : vector<16x32xbf16>, vector<32x128xbf16>, vector<16x128xf32> -> vector<16x128xf32>
    %68 = arith.addf %65, %67 : vector<16x128xf32>
    %69 = vector.extract_strided_slice %68 {offsets = [0, 0], sizes = [16, 96], strides = [1, 1]} : vector<16x128xf32> to vector<16x96xf32>
    %70 = arith.negf %69 : vector<16x96xf32>
    %71 = math.exp %70 : vector<16x96xf32>
    %cst_37 = arith.constant 1.000000e+00 : f32
    %72 = vector.broadcast %cst_37 : f32 to vector<16x96xf32>
    %73 = arith.addf %72, %71 : vector<16x96xf32>
    %74 = arith.divf %72, %73 : vector<16x96xf32>
    %75 = vector.extract_strided_slice %68 {offsets = [0, 96], sizes = [16, 32], strides = [1, 1]} : vector<16x128xf32> to vector<16x32xf32>
    %76 = math.tanh %75 : vector<16x32xf32>
    %77 = vector.extract_strided_slice %74 {offsets = [0, 0], sizes = [16, 32], strides = [1, 1]} : vector<16x96xf32> to vector<16x32xf32>
    %78 = vector.extract_strided_slice %74 {offsets = [0, 32], sizes = [16, 32], strides = [1, 1]} : vector<16x96xf32> to vector<16x32xf32>
    %79 = vector.extract_strided_slice %74 {offsets = [0, 64], sizes = [16, 32], strides = [1, 1]} : vector<16x96xf32> to vector<16x32xf32>
    %80 = arith.mulf %78, %60 : vector<16x32xf32>
    %81 = arith.mulf %77, %76 : vector<16x32xf32>
    %82 = arith.addf %80, %81 : vector<16x32xf32>
    %83 = math.tanh %82 : vector<16x32xf32>
    %84 = arith.mulf %79, %83 : vector<16x32xf32>
    %c2_i32 = arith.constant 2 : i32
    %85 = arith.index_cast %c2_i32 : i32 to index
    %c0_38 = arith.constant 0 : index
    %c0_39 = arith.constant 0 : index
    %86 = vector.load %arg13[%85, %c0_38, %c0_39] : memref<8x16x128xf32, #tpu.memory_space<vmem>>, vector<1x16x128xf32>
    %87 = vector.shape_cast %86 : vector<1x16x128xf32> to vector<16x128xf32>
    %88 = arith.truncf %84 : vector<16x32xf32> to vector<16x32xbf16>
    %cst_40 = arith.constant dense<0.000000e+00> : vector<16x128xf32>
    %89 = tpu.matmul %88, %38, %cst_40 {dimension_numbers = #tpu.dot_dimension_numbers<[1], [0], [0], [1], [0, 0, 1, 1], [], []>} : vector<16x32xbf16>, vector<32x128xbf16>, vector<16x128xf32> -> vector<16x128xf32>
    %90 = arith.addf %87, %89 : vector<16x128xf32>
    %91 = vector.extract_strided_slice %90 {offsets = [0, 0], sizes = [16, 96], strides = [1, 1]} : vector<16x128xf32> to vector<16x96xf32>
    %92 = arith.negf %91 : vector<16x96xf32>
    %93 = math.exp %92 : vector<16x96xf32>
    %cst_41 = arith.constant 1.000000e+00 : f32
    %94 = vector.broadcast %cst_41 : f32 to vector<16x96xf32>
    %95 = arith.addf %94, %93 : vector<16x96xf32>
    %96 = arith.divf %94, %95 : vector<16x96xf32>
    %97 = vector.extract_strided_slice %90 {offsets = [0, 96], sizes = [16, 32], strides = [1, 1]} : vector<16x128xf32> to vector<16x32xf32>
    %98 = math.tanh %97 : vector<16x32xf32>
    %99 = vector.extract_strided_slice %96 {offsets = [0, 0], sizes = [16, 32], strides = [1, 1]} : vector<16x96xf32> to vector<16x32xf32>
    %100 = vector.extract_strided_slice %96 {offsets = [0, 32], sizes = [16, 32], strides = [1, 1]} : vector<16x96xf32> to vector<16x32xf32>
    %101 = vector.extract_strided_slice %96 {offsets = [0, 64], sizes = [16, 32], strides = [1, 1]} : vector<16x96xf32> to vector<16x32xf32>
    %102 = arith.mulf %100, %82 : vector<16x32xf32>
    %103 = arith.mulf %99, %98 : vector<16x32xf32>
    %104 = arith.addf %102, %103 : vector<16x32xf32>
    %105 = math.tanh %104 : vector<16x32xf32>
    %106 = arith.mulf %101, %105 : vector<16x32xf32>
    %c3_i32 = arith.constant 3 : i32
    %107 = arith.index_cast %c3_i32 : i32 to index
    %c0_42 = arith.constant 0 : index
    %c0_43 = arith.constant 0 : index
    %108 = vector.load %arg13[%107, %c0_42, %c0_43] : memref<8x16x128xf32, #tpu.memory_space<vmem>>, vector<1x16x128xf32>
    %109 = vector.shape_cast %108 : vector<1x16x128xf32> to vector<16x128xf32>
    %110 = arith.truncf %106 : vector<16x32xf32> to vector<16x32xbf16>
    %cst_44 = arith.constant dense<0.000000e+00> : vector<16x128xf32>
    %111 = tpu.matmul %110, %38, %cst_44 {dimension_numbers = #tpu.dot_dimension_numbers<[1], [0], [0], [1], [0, 0, 1, 1], [], []>} : vector<16x32xbf16>, vector<32x128xbf16>, vector<16x128xf32> -> vector<16x128xf32>
    %112 = arith.addf %109, %111 : vector<16x128xf32>
    %113 = vector.extract_strided_slice %112 {offsets = [0, 0], sizes = [16, 96], strides = [1, 1]} : vector<16x128xf32> to vector<16x96xf32>
    %114 = arith.negf %113 : vector<16x96xf32>
    %115 = math.exp %114 : vector<16x96xf32>
    %cst_45 = arith.constant 1.000000e+00 : f32
    %116 = vector.broadcast %cst_45 : f32 to vector<16x96xf32>
    %117 = arith.addf %116, %115 : vector<16x96xf32>
    %118 = arith.divf %116, %117 : vector<16x96xf32>
    %119 = vector.extract_strided_slice %112 {offsets = [0, 96], sizes = [16, 32], strides = [1, 1]} : vector<16x128xf32> to vector<16x32xf32>
    %120 = math.tanh %119 : vector<16x32xf32>
    %121 = vector.extract_strided_slice %118 {offsets = [0, 0], sizes = [16, 32], strides = [1, 1]} : vector<16x96xf32> to vector<16x32xf32>
    %122 = vector.extract_strided_slice %118 {offsets = [0, 32], sizes = [16, 32], strides = [1, 1]} : vector<16x96xf32> to vector<16x32xf32>
    %123 = vector.extract_strided_slice %118 {offsets = [0, 64], sizes = [16, 32], strides = [1, 1]} : vector<16x96xf32> to vector<16x32xf32>
    %124 = arith.mulf %122, %104 : vector<16x32xf32>
    %125 = arith.mulf %121, %120 : vector<16x32xf32>
    %126 = arith.addf %124, %125 : vector<16x32xf32>
    %127 = math.tanh %126 : vector<16x32xf32>
    %128 = arith.mulf %123, %127 : vector<16x32xf32>
    %c4_i32 = arith.constant 4 : i32
    %129 = arith.index_cast %c4_i32 : i32 to index
    %c0_46 = arith.constant 0 : index
    %c0_47 = arith.constant 0 : index
    %130 = vector.load %arg13[%129, %c0_46, %c0_47] : memref<8x16x128xf32, #tpu.memory_space<vmem>>, vector<1x16x128xf32>
    %131 = vector.shape_cast %130 : vector<1x16x128xf32> to vector<16x128xf32>
    %132 = arith.truncf %128 : vector<16x32xf32> to vector<16x32xbf16>
    %cst_48 = arith.constant dense<0.000000e+00> : vector<16x128xf32>
    %133 = tpu.matmul %132, %38, %cst_48 {dimension_numbers = #tpu.dot_dimension_numbers<[1], [0], [0], [1], [0, 0, 1, 1], [], []>} : vector<16x32xbf16>, vector<32x128xbf16>, vector<16x128xf32> -> vector<16x128xf32>
    %134 = arith.addf %131, %133 : vector<16x128xf32>
    %135 = vector.extract_strided_slice %134 {offsets = [0, 0], sizes = [16, 96], strides = [1, 1]} : vector<16x128xf32> to vector<16x96xf32>
    %136 = arith.negf %135 : vector<16x96xf32>
    %137 = math.exp %136 : vector<16x96xf32>
    %cst_49 = arith.constant 1.000000e+00 : f32
    %138 = vector.broadcast %cst_49 : f32 to vector<16x96xf32>
    %139 = arith.addf %138, %137 : vector<16x96xf32>
    %140 = arith.divf %138, %139 : vector<16x96xf32>
    %141 = vector.extract_strided_slice %134 {offsets = [0, 96], sizes = [16, 32], strides = [1, 1]} : vector<16x128xf32> to vector<16x32xf32>
    %142 = math.tanh %141 : vector<16x32xf32>
    %143 = vector.extract_strided_slice %140 {offsets = [0, 0], sizes = [16, 32], strides = [1, 1]} : vector<16x96xf32> to vector<16x32xf32>
    %144 = vector.extract_strided_slice %140 {offsets = [0, 32], sizes = [16, 32], strides = [1, 1]} : vector<16x96xf32> to vector<16x32xf32>
    %145 = vector.extract_strided_slice %140 {offsets = [0, 64], sizes = [16, 32], strides = [1, 1]} : vector<16x96xf32> to vector<16x32xf32>
    %146 = arith.mulf %144, %126 : vector<16x32xf32>
    %147 = arith.mulf %143, %142 : vector<16x32xf32>
    %148 = arith.addf %146, %147 : vector<16x32xf32>
    %149 = math.tanh %148 : vector<16x32xf32>
    %150 = arith.mulf %145, %149 : vector<16x32xf32>
    %c5_i32 = arith.constant 5 : i32
    %151 = arith.index_cast %c5_i32 : i32 to index
    %c0_50 = arith.constant 0 : index
    %c0_51 = arith.constant 0 : index
    %152 = vector.load %arg13[%151, %c0_50, %c0_51] : memref<8x16x128xf32, #tpu.memory_space<vmem>>, vector<1x16x128xf32>
    %153 = vector.shape_cast %152 : vector<1x16x128xf32> to vector<16x128xf32>
    %154 = arith.truncf %150 : vector<16x32xf32> to vector<16x32xbf16>
    %cst_52 = arith.constant dense<0.000000e+00> : vector<16x128xf32>
    %155 = tpu.matmul %154, %38, %cst_52 {dimension_numbers = #tpu.dot_dimension_numbers<[1], [0], [0], [1], [0, 0, 1, 1], [], []>} : vector<16x32xbf16>, vector<32x128xbf16>, vector<16x128xf32> -> vector<16x128xf32>
    %156 = arith.addf %153, %155 : vector<16x128xf32>
    %157 = vector.extract_strided_slice %156 {offsets = [0, 0], sizes = [16, 96], strides = [1, 1]} : vector<16x128xf32> to vector<16x96xf32>
    %158 = arith.negf %157 : vector<16x96xf32>
    %159 = math.exp %158 : vector<16x96xf32>
    %cst_53 = arith.constant 1.000000e+00 : f32
    %160 = vector.broadcast %cst_53 : f32 to vector<16x96xf32>
    %161 = arith.addf %160, %159 : vector<16x96xf32>
    %162 = arith.divf %160, %161 : vector<16x96xf32>
    %163 = vector.extract_strided_slice %156 {offsets = [0, 96], sizes = [16, 32], strides = [1, 1]} : vector<16x128xf32> to vector<16x32xf32>
    %164 = math.tanh %163 : vector<16x32xf32>
    %165 = vector.extract_strided_slice %162 {offsets = [0, 0], sizes = [16, 32], strides = [1, 1]} : vector<16x96xf32> to vector<16x32xf32>
    %166 = vector.extract_strided_slice %162 {offsets = [0, 32], sizes = [16, 32], strides = [1, 1]} : vector<16x96xf32> to vector<16x32xf32>
    %167 = vector.extract_strided_slice %162 {offsets = [0, 64], sizes = [16, 32], strides = [1, 1]} : vector<16x96xf32> to vector<16x32xf32>
    %168 = arith.mulf %166, %148 : vector<16x32xf32>
    %169 = arith.mulf %165, %164 : vector<16x32xf32>
    %170 = arith.addf %168, %169 : vector<16x32xf32>
    %171 = math.tanh %170 : vector<16x32xf32>
    %172 = arith.mulf %167, %171 : vector<16x32xf32>
    %c6_i32 = arith.constant 6 : i32
    %173 = arith.index_cast %c6_i32 : i32 to index
    %c0_54 = arith.constant 0 : index
    %c0_55 = arith.constant 0 : index
    %174 = vector.load %arg13[%173, %c0_54, %c0_55] : memref<8x16x128xf32, #tpu.memory_space<vmem>>, vector<1x16x128xf32>
    %175 = vector.shape_cast %174 : vector<1x16x128xf32> to vector<16x128xf32>
    %176 = arith.truncf %172 : vector<16x32xf32> to vector<16x32xbf16>
    %cst_56 = arith.constant dense<0.000000e+00> : vector<16x128xf32>
    %177 = tpu.matmul %176, %38, %cst_56 {dimension_numbers = #tpu.dot_dimension_numbers<[1], [0], [0], [1], [0, 0, 1, 1], [], []>} : vector<16x32xbf16>, vector<32x128xbf16>, vector<16x128xf32> -> vector<16x128xf32>
    %178 = arith.addf %175, %177 : vector<16x128xf32>
    %179 = vector.extract_strided_slice %178 {offsets = [0, 0], sizes = [16, 96], strides = [1, 1]} : vector<16x128xf32> to vector<16x96xf32>
    %180 = arith.negf %179 : vector<16x96xf32>
    %181 = math.exp %180 : vector<16x96xf32>
    %cst_57 = arith.constant 1.000000e+00 : f32
    %182 = vector.broadcast %cst_57 : f32 to vector<16x96xf32>
    %183 = arith.addf %182, %181 : vector<16x96xf32>
    %184 = arith.divf %182, %183 : vector<16x96xf32>
    %185 = vector.extract_strided_slice %178 {offsets = [0, 96], sizes = [16, 32], strides = [1, 1]} : vector<16x128xf32> to vector<16x32xf32>
    %186 = math.tanh %185 : vector<16x32xf32>
    %187 = vector.extract_strided_slice %184 {offsets = [0, 0], sizes = [16, 32], strides = [1, 1]} : vector<16x96xf32> to vector<16x32xf32>
    %188 = vector.extract_strided_slice %184 {offsets = [0, 32], sizes = [16, 32], strides = [1, 1]} : vector<16x96xf32> to vector<16x32xf32>
    %189 = vector.extract_strided_slice %184 {offsets = [0, 64], sizes = [16, 32], strides = [1, 1]} : vector<16x96xf32> to vector<16x32xf32>
    %190 = arith.mulf %188, %170 : vector<16x32xf32>
    %191 = arith.mulf %187, %186 : vector<16x32xf32>
    %192 = arith.addf %190, %191 : vector<16x32xf32>
    %193 = math.tanh %192 : vector<16x32xf32>
    %194 = arith.mulf %189, %193 : vector<16x32xf32>
    %c7_i32 = arith.constant 7 : i32
    %195 = arith.index_cast %c7_i32 : i32 to index
    %c0_58 = arith.constant 0 : index
    %c0_59 = arith.constant 0 : index
    %196 = vector.load %arg13[%195, %c0_58, %c0_59] : memref<8x16x128xf32, #tpu.memory_space<vmem>>, vector<1x16x128xf32>
    %197 = vector.shape_cast %196 : vector<1x16x128xf32> to vector<16x128xf32>
    %198 = arith.truncf %194 : vector<16x32xf32> to vector<16x32xbf16>
    %cst_60 = arith.constant dense<0.000000e+00> : vector<16x128xf32>
    %199 = tpu.matmul %198, %38, %cst_60 {dimension_numbers = #tpu.dot_dimension_numbers<[1], [0], [0], [1], [0, 0, 1, 1], [], []>} : vector<16x32xbf16>, vector<32x128xbf16>, vector<16x128xf32> -> vector<16x128xf32>
    %200 = arith.addf %197, %199 : vector<16x128xf32>
    %201 = vector.extract_strided_slice %200 {offsets = [0, 0], sizes = [16, 96], strides = [1, 1]} : vector<16x128xf32> to vector<16x96xf32>
    %202 = arith.negf %201 : vector<16x96xf32>
    %203 = math.exp %202 : vector<16x96xf32>
    %cst_61 = arith.constant 1.000000e+00 : f32
    %204 = vector.broadcast %cst_61 : f32 to vector<16x96xf32>
    %205 = arith.addf %204, %203 : vector<16x96xf32>
    %206 = arith.divf %204, %205 : vector<16x96xf32>
    %207 = vector.extract_strided_slice %200 {offsets = [0, 96], sizes = [16, 32], strides = [1, 1]} : vector<16x128xf32> to vector<16x32xf32>
    %208 = math.tanh %207 : vector<16x32xf32>
    %209 = vector.extract_strided_slice %206 {offsets = [0, 0], sizes = [16, 32], strides = [1, 1]} : vector<16x96xf32> to vector<16x32xf32>
    %210 = vector.extract_strided_slice %206 {offsets = [0, 32], sizes = [16, 32], strides = [1, 1]} : vector<16x96xf32> to vector<16x32xf32>
    %211 = vector.extract_strided_slice %206 {offsets = [0, 64], sizes = [16, 32], strides = [1, 1]} : vector<16x96xf32> to vector<16x32xf32>
    %212 = arith.mulf %210, %192 : vector<16x32xf32>
    %213 = arith.mulf %209, %208 : vector<16x32xf32>
    %214 = arith.addf %212, %213 : vector<16x32xf32>
    %215 = math.tanh %214 : vector<16x32xf32>
    %216 = arith.mulf %211, %215 : vector<16x32xf32>
    %c8_i32 = arith.constant 8 : i32
    %217 = arith.truncf %216 : vector<16x32xf32> to vector<16x32xbf16>
    %c0_62 = arith.constant 0 : index
    %c0_63 = arith.constant 0 : index
    %218 = vector.load %arg10[%c0_62, %c0_63] : memref<32x4xbf16, #tpu.memory_space<vmem>>, vector<32x4xbf16>
    %cst_64 = arith.constant dense<0.000000e+00> : vector<16x4xf32>
    %219 = tpu.matmul %217, %218, %cst_64 {dimension_numbers = #tpu.dot_dimension_numbers<[1], [0], [0], [1], [0, 0, 1, 1], [], []>} : vector<16x32xbf16>, vector<32x4xbf16>, vector<16x4xf32> -> vector<16x4xf32>
    %c0_65 = arith.constant 0 : index
    %c0_66 = arith.constant 0 : index
    %220 = vector.load %arg11[%c0_65, %c0_66] : memref<1x4xf32, #tpu.memory_space<vmem>>, vector<1x4xf32>
    %221 = vector.broadcast %220 : vector<1x4xf32> to vector<16x4xf32>
    %222 = arith.addf %219, %221 : vector<16x4xf32>
    %c0_67 = arith.constant 0 : index
    %c0_68 = arith.constant 0 : index
    %c0_69 = arith.constant 0 : index
    %223 = vector.load %arg12[%c0_67, %c0_68, %c0_69] : memref<1x16x4xf32, #tpu.memory_space<vmem>>, vector<1x16x4xf32>
    %224 = vector.shape_cast %223 : vector<1x16x4xf32> to vector<16x4xf32>
    %225 = vector.shape_cast %222 : vector<16x4xf32> to vector<1x16x4xf32>
    tpu.vector_store %arg12[%c0_67, %c0_68, %c0_69], %225 {strides = array<i32>} : memref<1x16x4xf32, #tpu.memory_space<vmem>>, vector<1x16x4xf32>,
    return
  }
  func.func @transform_0(%arg0: i32) -> (i32, i32, i32) {
    %c0_i32 = arith.constant 0 : i32
    %c0_i32_0 = arith.constant 0 : i32
    %c0_i32_1 = arith.constant 0 : i32
    return %arg0, %c0_i32, %c0_i32_0 : i32, i32, i32
  }
  func.func @transform_1(%arg0: i32) -> (i32, i32, i32) {
    %c0_i32 = arith.constant 0 : i32
    %c0_i32_0 = arith.constant 0 : i32
    %c0_i32_1 = arith.constant 0 : i32
    return %arg0, %c0_i32, %c0_i32_0 : i32, i32, i32
  }
  func.func @transform_2(%arg0: i32) -> (i32, i32) {
    %c0_i32 = arith.constant 0 : i32
    %c0_i32_0 = arith.constant 0 : i32
    %c0_i32_1 = arith.constant 0 : i32
    return %c0_i32, %c0_i32_0 : i32, i32
  }
  func.func @transform_3(%arg0: i32) -> (i32, i32) {
    %c0_i32 = arith.constant 0 : i32
    %c0_i32_0 = arith.constant 0 : i32
    %c0_i32_1 = arith.constant 0 : i32
    return %c0_i32, %c0_i32_0 : i32, i32
  }
  func.func @transform_4(%arg0: i32) -> (i32, i32) {
    %c0_i32 = arith.constant 0 : i32
    %c0_i32_0 = arith.constant 0 : i32
    %c0_i32_1 = arith.constant 0 : i32
    return %c0_i32, %c0_i32_0 : i32, i32
  }
  func.func @transform_5(%arg0: i32) -> (i32, i32) {
    %c0_i32 = arith.constant 0 : i32
    %c0_i32_0 = arith.constant 0 : i32
    %c0_i32_1 = arith.constant 0 : i32
    return %c0_i32, %c0_i32_0 : i32, i32
  }
  func.func @transform_6(%arg0: i32) -> (i32, i32) {
    %c0_i32 = arith.constant 0 : i32
    %c0_i32_0 = arith.constant 0 : i32
    %c0_i32_1 = arith.constant 0 : i32
    return %c0_i32, %c0_i32_0 : i32, i32
  }
  func.func @transform_7(%arg0: i32) -> (i32, i32) {
    %c0_i32 = arith.constant 0 : i32
    %c0_i32_0 = arith.constant 0 : i32
    %c0_i32_1 = arith.constant 0 : i32
    return %c0_i32, %c0_i32_0 : i32, i32
  }
  func.func @transform_8(%arg0: i32) -> (i32, i32) {
    %c0_i32 = arith.constant 0 : i32
    %c0_i32_0 = arith.constant 0 : i32
    %c0_i32_1 = arith.constant 0 : i32
    return %c0_i32, %c0_i32_0 : i32, i32
  }
  func.func @transform_9(%arg0: i32) -> (i32, i32) {
    %c0_i32 = arith.constant 0 : i32
    %c0_i32_0 = arith.constant 0 : i32
    %c0_i32_1 = arith.constant 0 : i32
    return %c0_i32, %c0_i32_0 : i32, i32
  }
  func.func @transform_10(%arg0: i32) -> (i32, i32) {
    %c0_i32 = arith.constant 0 : i32
    %c0_i32_0 = arith.constant 0 : i32
    %c0_i32_1 = arith.constant 0 : i32
    return %c0_i32, %c0_i32_0 : i32, i32
  }
  func.func @transform_11(%arg0: i32) -> (i32, i32, i32) {
    %c0_i32 = arith.constant 0 : i32
    %c0_i32_0 = arith.constant 0 : i32
    %c0_i32_1 = arith.constant 0 : i32
    return %arg0, %c0_i32, %c0_i32_0 : i32, i32, i32
  }
}

</mosaic_0001>

<llo_original>
// kernel: tpu_custom_call.1
$region0: #{tpu_custom_call.1}
  #allocation0 [shape = 'u32[]', space=smem, size = 0x4, offset = 0x4, fixed_abs, tag = 'smem constant byte address 0x4 - core index']
  #allocation1 [shape = 'u32[72,128]{1,0:T(1,128)}', space=vmem, size = 0x9000, scoped, tag = 'internal scratch']
  #allocation2 [shape = 'f32[8,16,128]{2,1,0:T(8,128)}', space=vmem, size = 0x10000, scoped, tag = 'scratch operand']
  %s0 = inlined_call_operand.vmem [shape: bf16[2,128,128], index: 0, kind: input, shape index: {}]
  %s1 = inlined_call_operand.vmem [shape: bf16[2,128,4], index: 1, kind: input, shape index: {}]
  %s2 = inlined_call_operand.vmem [shape: bf16[4,64], index: 2, kind: input, shape index: {}]
  %s3 = inlined_call_operand.vmem [shape: f32[1,32], index: 3, kind: input, shape index: {}]
  %s4 = inlined_call_operand.vmem [shape: bf16[32,64], index: 4, kind: input, shape index: {}]
  %s5 = inlined_call_operand.hbm [shape: f32[1,32], index: 5, kind: input, shape index: {}]
  %s6 = inlined_call_operand.hbm [shape: bf16[32,128], index: 6, kind: input, shape index: {}]
  %s7 = inlined_call_operand.hbm [shape: bf16[32,128], index: 7, kind: input, shape index: {}]
  %s8 = inlined_call_operand.vmem [shape: f32[1,128], index: 8, kind: input, shape index: {}]
  %s9 = inlined_call_operand.vmem [shape: bf16[32,4], index: 9, kind: input, shape index: {}]
  %s10 = inlined_call_operand.vmem [shape: f32[1,4], index: 10, kind: input, shape index: {}]
  %s11 = inlined_call_operand.vmem [shape: f32[2,16,4], index: 11, kind: output, shape index: {}]
  %s12 = sld [smem:[#allocation0]]
  $region89: #{tpu_custom_call.1} parent=0
    _
  %s14 = ssub.s32 1, %s12
  %s15 = scalar_select 0, %s14, %s12
  $region1: #{tpu_custom_call.1} parent=0
    #allocation3 [shape = 'u8[512]{0}', space=vmem, size = 0x400, scoped, tag = 'input window, operand 5, single buffered']
    #allocation4 [shape = 's32[2]{0}', space=sflag, size = 0x8, scoped, tag = 'scoped memory for tpu_custom_call.1']
    #allocation5 [shape = 'u8[8192]{0}', space=vmem, size = 0x2000, scoped, tag = 'input window, operand 6, single buffered']
    #allocation6 [shape = 's32[1]{0}', space=sflag, size = 0x4, scoped, tag = 'scoped memory for tpu_custom_call.1']
    #allocation7 [shape = 'u8[8192]{0}', space=vmem, size = 0x2000, scoped, tag = 'input window, operand 7, single buffered']
    %16 = vsyncpa [#allocation4], 0
    %17 = vsyncpa [#allocation6], 0
    loop: start=0, step=1, limit=4
    $region2: #{tpu_custom_call.1} parent=1 // loop_pre_header
      _
    $region3: #{tpu_custom_call.1} parent=1 // loop_header
      %s19 = sphi 0, %s23
      %p20 = scmp.ge.s32.totalorder %s19, 4
      %s29 = sphi 0, %s31
      %s32 = sphi 0, %s29
      %s33 = sphi 0, %s32
      %s49 = sphi 0, %s33
      %s55 = sphi 0, %s57
      %s58 = sphi 0, %s55
      %s59 = sphi 0, %s58
      %s75 = sphi 0, %s59
      %s79 = sphi 0, %s79
      %s81 = sphi 0, %s79
      %s82 = sphi 0, %s81
      %s96 = sphi 0, %s82
      %s100 = sphi 0, %s100
      %s102 = sphi 0, %s100
      %s103 = sphi 0, %s102
      %s117 = sphi 0, %s103
      %s121 = sphi 0, %s121
      %s123 = sphi 0, %s121
      %s124 = sphi 0, %s123
      %s138 = sphi 0, %s124
      %s142 = sphi 0, %s142
      %s144 = sphi 0, %s142
      %s145 = sphi 0, %s144
      %s159 = sphi 0, %s145
      %s163 = sphi 0, %s163
      %s165 = sphi 0, %s163
      %s166 = sphi 0, %s165
      %s180 = sphi 0, %s166
      %s184 = sphi 0, %s184
      %s186 = sphi 0, %s184
      %s187 = sphi 0, %s186
      %s201 = sphi 0, %s187
      %s205 = sphi 0, %s205
      %s207 = sphi 0, %s205
      %s208 = sphi 0, %s207
      %s222 = sphi 0, %s208
      %s226 = sphi 0, %s226
      %s228 = sphi 0, %s226
      %s229 = sphi 0, %s228
      %s243 = sphi 0, %s229
      %s247 = sphi 0, %s247
      %s249 = sphi 0, %s247
      %s250 = sphi 0, %s249
      %s264 = sphi 0, %s250
      %s270 = sphi 0, %s272
      %s273 = sphi 0, %s270
      %s274 = sphi 0, %s273
      %s290 = sphi 0, %s274
    $region4: #{tpu_custom_call.1} parent=1 // loop_header_branch
      %22 = sbr.rel (%p20) target = $region8
    $region5: #{tpu_custom_call.1} parent=1 // loop_body
      %s24 = ssub.s32 %s19, 1
      %s25 = ssub.s32 %s19, 2
      %s26 = sadd.s32 %s19, 1
      %s27 = ssub.s32 %s19, %s26
      %p28 = scmp.eq.s32.totalorder %s27, 0
      %s30 = sadd.s32 %s29, 1
      %s31 = scalar_select %p28, %s29, %s30
      %p34 = pneg %p28
      %p35 = scmp.eq.s32.totalorder %s19, 1
      %p36 = por %p34, %p35
      %p37 = scmp.ne.s32.totalorder %s29, %s32
      %p38 = scmp.eq.s32.totalorder %s19, 0
      %p39 = por %p37, %p38
      %p40 = scmp.ne.s32.totalorder %s29, %s32
      %p41 = scmp.eq.s32.totalorder %s24, 1
      %p42 = por %p40, %p41
      %p43 = scmp.ne.s32.totalorder %s32, %s33
      %p44 = scmp.eq.s32.totalorder %s24, 0
      %p45 = por %p43, %p44
      %p46 = scmp.ne.s32.totalorder %s32, %s33
      %p47 = scmp.eq.s32.totalorder %s25, 1
      %p48 = por %p46, %p47
      %p50 = scmp.ne.s32.totalorder %s33, %s49
      %p51 = scmp.eq.s32.totalorder %s25, 0
      %p52 = por %p50, %p51
      %s53 = ssub.s32 %s19, %s26
      %p54 = scmp.eq.s32.totalorder %s53, 0
      %s56 = sadd.s32 %s55, 1
      %s57 = scalar_select %p54, %s55, %s56
      %p60 = pneg %p54
      %p61 = scmp.eq.s32.totalorder %s19, 1
      %p62 = por %p60, %p61
      %p63 = scmp.ne.s32.totalorder %s55, %s58
      %p64 = scmp.eq.s32.totalorder %s19, 0
      %p65 = por %p63, %p64
      %p66 = scmp.ne.s32.totalorder %s55, %s58
      %p67 = scmp.eq.s32.totalorder %s24, 1
      %p68 = por %p66, %p67
      %p69 = scmp.ne.s32.totalorder %s58, %s59
      %p70 = scmp.eq.s32.totalorder %s24, 0
      %p71 = por %p69, %p70
      %p72 = scmp.ne.s32.totalorder %s58, %s59
      %p73 = scmp.eq.s32.totalorder %s25, 1
      %p74 = por %p72, %p73
      %p76 = scmp.ne.s32.totalorder %s59, %s75
      %p77 = scmp.eq.s32.totalorder %s25, 0
      %p78 = por %p76, %p77
      %s80 = sadd.s32 %s79, 1
      %p83 = scmp.eq.s32.totalorder %s19, 1
      %p84 = scmp.ne.s32.totalorder %s79, %s81
      %p85 = scmp.eq.s32.totalorder %s19, 0
      %p86 = por %p84, %p85
      %p87 = scmp.ne.s32.totalorder %s79, %s81
      %p88 = scmp.eq.s32.totalorder %s24, 1
      %p89 = por %p87, %p88
      %p90 = scmp.ne.s32.totalorder %s81, %s82
      %p91 = scmp.eq.s32.totalorder %s24, 0
      %p92 = por %p90, %p91
      %p93 = scmp.ne.s32.totalorder %s81, %s82
      %p94 = scmp.eq.s32.totalorder %s25, 1
      %p95 = por %p93, %p94
      %p97 = scmp.ne.s32.totalorder %s82, %s96
      %p98 = scmp.eq.s32.totalorder %s25, 0
      %p99 = por %p97, %p98
      %s101 = sadd.s32 %s100, 1
      %p104 = scmp.eq.s32.totalorder %s19, 1
      %p105 = scmp.ne.s32.totalorder %s100, %s102
      %p106 = scmp.eq.s32.totalorder %s19, 0
      %p107 = por %p105, %p106
      %p108 = scmp.ne.s32.totalorder %s100, %s102
      %p109 = scmp.eq.s32.totalorder %s24, 1
      %p110 = por %p108, %p109
      %p111 = scmp.ne.s32.totalorder %s102, %s103
      %p112 = scmp.eq.s32.totalorder %s24, 0
      %p113 = por %p111, %p112
      %p114 = scmp.ne.s32.totalorder %s102, %s103
      %p115 = scmp.eq.s32.totalorder %s25, 1
      %p116 = por %p114, %p115
      %p118 = scmp.ne.s32.totalorder %s103, %s117
      %p119 = scmp.eq.s32.totalorder %s25, 0
      %p120 = por %p118, %p119
      %s122 = sadd.s32 %s121, 1
      %p125 = scmp.eq.s32.totalorder %s19, 1
      %p126 = scmp.ne.s32.totalorder %s121, %s123
      %p127 = scmp.eq.s32.totalorder %s19, 0
      %p128 = por %p126, %p127
      %p129 = scmp.ne.s32.totalorder %s121, %s123
      %p130 = scmp.eq.s32.totalorder %s24, 1
      %p131 = por %p129, %p130
      %p132 = scmp.ne.s32.totalorder %s123, %s124
      %p133 = scmp.eq.s32.totalorder %s24, 0
      %p134 = por %p132, %p133
      %p135 = scmp.ne.s32.totalorder %s123, %s124
      %p136 = scmp.eq.s32.totalorder %s25, 1
      %p137 = por %p135, %p136
      %p139 = scmp.ne.s32.totalorder %s124, %s138
      %p140 = scmp.eq.s32.totalorder %s25, 0
      %p141 = por %p139, %p140
      %s143 = sadd.s32 %s142, 1
      %p146 = scmp.eq.s32.totalorder %s19, 1
      %p147 = scmp.ne.s32.totalorder %s142, %s144
      %p148 = scmp.eq.s32.totalorder %s19, 0
      %p149 = por %p147, %p148
      %p150 = scmp.ne.s32.totalorder %s142, %s144
      %p151 = scmp.eq.s32.totalorder %s24, 1
      %p152 = por %p150, %p151
      %p153 = scmp.ne.s32.totalorder %s144, %s145
      %p154 = scmp.eq.s32.totalorder %s24, 0
      %p155 = por %p153, %p154
      %p156 = scmp.ne.s32.totalorder %s144, %s145
      %p157 = scmp.eq.s32.totalorder %s25, 1
      %p158 = por %p156, %p157
      %p160 = scmp.ne.s32.totalorder %s145, %s159
      %p161 = scmp.eq.s32.totalorder %s25, 0
      %p162 = por %p160, %p161
      %s164 = sadd.s32 %s163, 1
      %p167 = scmp.eq.s32.totalorder %s19, 1
      %p168 = scmp.ne.s32.totalorder %s163, %s165
      %p169 = scmp.eq.s32.totalorder %s19, 0
      %p170 = por %p168, %p169
      %p171 = scmp.ne.s32.totalorder %s163, %s165
      %p172 = scmp.eq.s32.totalorder %s24, 1
      %p173 = por %p171, %p172
      %p174 = scmp.ne.s32.totalorder %s165, %s166
      %p175 = scmp.eq.s32.totalorder %s24, 0
      %p176 = por %p174, %p175
      %p177 = scmp.ne.s32.totalorder %s165, %s166
      %p178 = scmp.eq.s32.totalorder %s25, 1
      %p179 = por %p177, %p178
      %p181 = scmp.ne.s32.totalorder %s166, %s180
      %p182 = scmp.eq.s32.totalorder %s25, 0
      %p183 = por %p181, %p182
      %s185 = sadd.s32 %s184, 1
      %p188 = scmp.eq.s32.totalorder %s19, 1
      %p189 = scmp.ne.s32.totalorder %s184, %s186
      %p190 = scmp.eq.s32.totalorder %s19, 0
      %p191 = por %p189, %p190
      %p192 = scmp.ne.s32.totalorder %s184, %s186
      %p193 = scmp.eq.s32.totalorder %s24, 1
      %p194 = por %p192, %p193
      %p195 = scmp.ne.s32.totalorder %s186, %s187
      %p196 = scmp.eq.s32.totalorder %s24, 0
      %p197 = por %p195, %p196
      %p198 = scmp.ne.s32.totalorder %s186, %s187
      %p199 = scmp.eq.s32.totalorder %s25, 1
      %p200 = por %p198, %p199
      %p202 = scmp.ne.s32.totalorder %s187, %s201
      %p203 = scmp.eq.s32.totalorder %s25, 0
      %p204 = por %p202, %p203
      %s206 = sadd.s32 %s205, 1
      %p209 = scmp.eq.s32.totalorder %s19, 1
      %p210 = scmp.ne.s32.totalorder %s205, %s207
      %p211 = scmp.eq.s32.totalorder %s19, 0
      %p212 = por %p210, %p211
      %p213 = scmp.ne.s32.totalorder %s205, %s207
      %p214 = scmp.eq.s32.totalorder %s24, 1
      %p215 = por %p213, %p214
      %p216 = scmp.ne.s32.totalorder %s207, %s208
      %p217 = scmp.eq.s32.totalorder %s24, 0
      %p218 = por %p216, %p217
      %p219 = scmp.ne.s32.totalorder %s207, %s208
      %p220 = scmp.eq.s32.totalorder %s25, 1
      %p221 = por %p219, %p220
      %p223 = scmp.ne.s32.totalorder %s208, %s222
      %p224 = scmp.eq.s32.totalorder %s25, 0
      %p225 = por %p223, %p224
      %s227 = sadd.s32 %s226, 1
      %p230 = scmp.eq.s32.totalorder %s19, 1
      %p231 = scmp.ne.s32.totalorder %s226, %s228
      %p232 = scmp.eq.s32.totalorder %s19, 0
      %p233 = por %p231, %p232
      %p234 = scmp.ne.s32.totalorder %s226, %s228
      %p235 = scmp.eq.s32.totalorder %s24, 1
      %p236 = por %p234, %p235
      %p237 = scmp.ne.s32.totalorder %s228, %s229
      %p238 = scmp.eq.s32.totalorder %s24, 0
      %p239 = por %p237, %p238
      %p240 = scmp.ne.s32.totalorder %s228, %s229
      %p241 = scmp.eq.s32.totalorder %s25, 1
      %p242 = por %p240, %p241
      %p244 = scmp.ne.s32.totalorder %s229, %s243
      %p245 = scmp.eq.s32.totalorder %s25, 0
      %p246 = por %p244, %p245
      %s248 = sadd.s32 %s247, 1
      %p251 = scmp.eq.s32.totalorder %s19, 1
      %p252 = scmp.ne.s32.totalorder %s247, %s249
      %p253 = scmp.eq.s32.totalorder %s19, 0
      %p254 = por %p252, %p253
      %p255 = scmp.ne.s32.totalorder %s247, %s249
      %p256 = scmp.eq.s32.totalorder %s24, 1
      %p257 = por %p255, %p256
      %p258 = scmp.ne.s32.totalorder %s249, %s250
      %p259 = scmp.eq.s32.totalorder %s24, 0
      %p260 = por %p258, %p259
      %p261 = scmp.ne.s32.totalorder %s249, %s250
      %p262 = scmp.eq.s32.totalorder %s25, 1
      %p263 = por %p261, %p262
      %p265 = scmp.ne.s32.totalorder %s250, %s264
      %p266 = scmp.eq.s32.totalorder %s25, 0
      %p267 = por %p265, %p266
      %s268 = ssub.s32 %s19, %s26
      %p269 = scmp.eq.s32.totalorder %s268, 0
      %s271 = sadd.s32 %s270, 1
      %s272 = scalar_select %p269, %s270, %s271
      %p275 = pneg %p269
      %p276 = scmp.eq.s32.totalorder %s19, 1
      %p277 = por %p275, %p276
      %p278 = scmp.ne.s32.totalorder %s270, %s273
      %p279 = scmp.eq.s32.totalorder %s19, 0
      %p280 = por %p278, %p279
      %p281 = scmp.ne.s32.totalorder %s270, %s273
      %p282 = scmp.eq.s32.totalorder %s24, 1
      %p283 = por %p281, %p282
      %p284 = scmp.ne.s32.totalorder %s273, %s274
      %p285 = scmp.eq.s32.totalorder %s24, 0
      %p286 = por %p284, %p285
      %p287 = scmp.ne.s32.totalorder %s273, %s274
      %p288 = scmp.eq.s32.totalorder %s25, 1
      %p289 = por %p287, %p288
      %p291 = scmp.ne.s32.totalorder %s274, %s290
      %p292 = scmp.eq.s32.totalorder %s25, 0
      %p293 = por %p291, %p292
      %p294 = scmp.le.s32.totalorder 1, %s19
      %p295 = scmp.lt.s32.totalorder %s19, 3
      %p296 = pnand %p294, %p295
      %p297 = pneg %p296
      // Predicated region
      $region9: #{tpu_custom_call.1} parent=5 // pred_check
        _
      $region10: #{tpu_custom_call.1} parent=5 // pred_check_branch
        %299 = sbr.rel (%p296) target = $region12
      $region11: #{tpu_custom_call.1} parent=5 // pred_region
        %s300 = ssub.s32 %s19, 1
        // Predicated region
        $region13: #{tpu_custom_call.1} parent=11 // pred_check
          %p301 = pneg %p92
        $region14: #{tpu_custom_call.1} parent=11 // pred_check_branch
          %303 = sbr.rel (%p301) target = $region16
        $region15: #{tpu_custom_call.1} parent=11 // pred_region
          _
        $region16: #{tpu_custom_call.1} parent=11 // pred_fallthru
          _
        // Predicated region
        $region17: #{tpu_custom_call.1} parent=11 // pred_check
          %p304 = pneg %p113
        $region18: #{tpu_custom_call.1} parent=11 // pred_check_branch
          %306 = sbr.rel (%p304) target = $region20
        $region19: #{tpu_custom_call.1} parent=11 // pred_region
          _
        $region20: #{tpu_custom_call.1} parent=11 // pred_fallthru
          _
        // Predicated region
        $region21: #{tpu_custom_call.1} parent=11 // pred_check
          %p307 = pneg %p134
        $region22: #{tpu_custom_call.1} parent=11 // pred_check_branch
          %309 = sbr.rel (%p307) target = $region24
        $region23: #{tpu_custom_call.1} parent=11 // pred_region
          _
        $region24: #{tpu_custom_call.1} parent=11 // pred_fallthru
          _
        // Predicated region
        $region25: #{tpu_custom_call.1} parent=11 // pred_check
          %p310 = pneg %p155
        $region26: #{tpu_custom_call.1} parent=11 // pred_check_branch
          %312 = sbr.rel (%p310) target = $region28
        $region27: #{tpu_custom_call.1} parent=11 // pred_region
          %314 = vsyncadd [#allocation4], 0
          %s316 = sshll.u32 %s5, 4
          %s317 = int_to_ptr.hbm [resolvable:$true] %s316
          %s318 = sshll.u32 [#allocation3], 4
          %s319 = int_to_ptr.vmem [resolvable:$true] %s318
          %321 = dma.hbm_to_vmem [thread:$0]  %s317, 16, %s319, [#allocation4]
        $region28: #{tpu_custom_call.1} parent=11 // pred_fallthru
          _
        // Predicated region
        $region29: #{tpu_custom_call.1} parent=11 // pred_check
          %p322 = pneg %p176
        $region30: #{tpu_custom_call.1} parent=11 // pred_check_branch
          %324 = sbr.rel (%p322) target = $region32
        $region31: #{tpu_custom_call.1} parent=11 // pred_region
          %326 = vsyncadd [#allocation6], 0
          %s327 = sshll.u32 %s6, 4
          %s328 = int_to_ptr.hbm [resolvable:$true] %s327
          %s329 = sshll.u32 [#allocation5], 4
          %s330 = int_to_ptr.vmem [resolvable:$true] %s329
          %335 = dma.hbm_to_vmem [thread:$0]  %s328, 256, %s330, [#allocation6], 64, 64, 4
        $region32: #{tpu_custom_call.1} parent=11 // pred_fallthru
          _
        // Predicated region
        $region33: #{tpu_custom_call.1} parent=11 // pred_check
          %p336 = pneg %p197
        $region34: #{tpu_custom_call.1} parent=11 // pred_check_branch
          %338 = sbr.rel (%p336) target = $region36
        $region35: #{tpu_custom_call.1} parent=11 // pred_region
          %340 = vsyncadd [#allocation6], 0
          %s341 = sshll.u32 %s7, 4
          %s342 = int_to_ptr.hbm [resolvable:$true] %s341
          %s343 = sshll.u32 [#allocation7], 4
          %s344 = int_to_ptr.vmem [resolvable:$true] %s343
          %349 = dma.hbm_to_vmem [thread:$0]  %s342, 256, %s344, [#allocation6], 64, 64, 4
        $region36: #{tpu_custom_call.1} parent=11 // pred_fallthru
          _
        // Predicated region
        $region37: #{tpu_custom_call.1} parent=11 // pred_check
          %p350 = pneg %p218
        $region38: #{tpu_custom_call.1} parent=11 // pred_check_branch
          %352 = sbr.rel (%p350) target = $region40
        $region39: #{tpu_custom_call.1} parent=11 // pred_region
          _
        $region40: #{tpu_custom_call.1} parent=11 // pred_fallthru
          _
        // Predicated region
        $region41: #{tpu_custom_call.1} parent=11 // pred_check
          %p353 = pneg %p239
        $region42: #{tpu_custom_call.1} parent=11 // pred_check_branch
          %355 = sbr.rel (%p353) target = $region44
        $region43: #{tpu_custom_call.1} parent=11 // pred_region
          _
        $region44: #{tpu_custom_call.1} parent=11 // pred_fallthru
          _
        // Predicated region
        $region45: #{tpu_custom_call.1} parent=11 // pred_check
          %p356 = pneg %p260
        $region46: #{tpu_custom_call.1} parent=11 // pred_check_branch
          %358 = sbr.rel (%p356) target = $region48
        $region47: #{tpu_custom_call.1} parent=11 // pred_region
          _
        $region48: #{tpu_custom_call.1} parent=11 // pred_fallthru
          _
      $region12: #{tpu_custom_call.1} parent=5 // pred_fallthru
        _
      %p359 = scmp.lt.s32.totalorder %s19, 2
      // Predicated region
      $region49: #{tpu_custom_call.1} parent=5 // pred_check
        %p360 = pneg %p359
      $region50: #{tpu_custom_call.1} parent=5 // pred_check_branch
        %362 = sbr.rel (%p360) target = $region52
      $region51: #{tpu_custom_call.1} parent=5 // pred_region
        // Predicated region
        $region53: #{tpu_custom_call.1} parent=51 // pred_check
          %p363 = pneg %p39
        $region54: #{tpu_custom_call.1} parent=51 // pred_check_branch
          %365 = sbr.rel (%p363) target = $region56
        $region55: #{tpu_custom_call.1} parent=51 // pred_region
          %p366 = scmp.lt.s32.totalorder %s19, 1
          %s367 = scalar_select %p366, %s19, 1
          %s368 = smul.addr %s367, 16
          %s369 = smul.addr %s368, 4
          %s370 = scalar_lea.vmem %s0, %s369
        $region56: #{tpu_custom_call.1} parent=51 // pred_fallthru
          _
        // Predicated region
        $region57: #{tpu_custom_call.1} parent=51 // pred_check
          %p371 = pneg %p65
        $region58: #{tpu_custom_call.1} parent=51 // pred_check_branch
          %373 = sbr.rel (%p371) target = $region60
        $region59: #{tpu_custom_call.1} parent=51 // pred_region
          %p374 = scmp.lt.s32.totalorder %s19, 1
          %s375 = scalar_select %p374, %s19, 1
          %s376 = smul.addr %s375, 16
          %s377 = smul.addr %s376, 4
          %s378 = scalar_lea.vmem %s1, %s377
        $region60: #{tpu_custom_call.1} parent=51 // pred_fallthru
          _
      $region52: #{tpu_custom_call.1} parent=5 // pred_fallthru
        _
      %p379 = scmp.le.s32.totalorder 1, %s19
      %p380 = scmp.lt.s32.totalorder %s19, 3
      %p381 = pnand %p379, %p380
      %p382 = pneg %p381
      // Predicated region
      $region61: #{tpu_custom_call.1} parent=5 // pred_check
        _
      $region62: #{tpu_custom_call.1} parent=5 // pred_check_branch
        %384 = sbr.rel (%p381) target = $region64
      $region63: #{tpu_custom_call.1} parent=5 // pred_region
        %s385 = ssub.s32 %s19, 1
        // Predicated region
        $region65: #{tpu_custom_call.1} parent=63 // pred_check
          %p386 = pneg %p155
        $region66: #{tpu_custom_call.1} parent=63 // pred_check_branch
          %388 = sbr.rel (%p386) target = $region68
        $region67: #{tpu_custom_call.1} parent=63 // pred_region
          %390 = dma.done [#allocation4], 16
        $region68: #{tpu_custom_call.1} parent=63 // pred_fallthru
          _
        // Predicated region
        $region69: #{tpu_custom_call.1} parent=63 // pred_check
          %p391 = pneg %p176
        $region70: #{tpu_custom_call.1} parent=63 // pred_check_branch
          %393 = sbr.rel (%p391) target = $region72
        $region71: #{tpu_custom_call.1} parent=63 // pred_region
          %395 = dma.done [#allocation6], 256
        $region72: #{tpu_custom_call.1} parent=63 // pred_fallthru
          _
        // Predicated region
        $region73: #{tpu_custom_call.1} parent=63 // pred_check
          %p396 = pneg %p197
        $region74: #{tpu_custom_call.1} parent=63 // pred_check_branch
          %398 = sbr.rel (%p396) target = $region76
        $region75: #{tpu_custom_call.1} parent=63 // pred_region
          %400 = dma.done [#allocation6], 256
        $region76: #{tpu_custom_call.1} parent=63 // pred_fallthru
          _
        %p401 = scmp.lt.s32.totalorder %s24, 1
        %s402 = scalar_select %p401, %s24, 1
        %s403 = smul.addr %s402, 16
        %s404 = smul.addr %s403, 4
        %s405 = scalar_lea.vmem %s0, %s404
        %p406 = pneg %p45
        %p407 = pneg %p42
        %p408 = scmp.lt.s32.totalorder %s24, 1
        %s409 = scalar_select %p408, %s24, 1
        %s410 = smul.addr %s409, 16
        %s411 = smul.addr %s410, 4
        %s412 = scalar_lea.vmem %s1, %s411
        %p413 = pneg %p71
        %p414 = pneg %p68
        %p415 = pneg %p92
        %p416 = pneg %p89
        %p417 = pneg %p113
        %p418 = pneg %p110
        %p419 = pneg %p134
        %p420 = pneg %p131
        %p421 = pneg %p155
        %p422 = pneg %p152
        %p423 = pneg %p176
        %p424 = pneg %p173
        %p425 = pneg %p197
        %p426 = pneg %p194
        %p427 = pneg %p218
        %p428 = pneg %p215
        %p429 = pneg %p239
        %p430 = pneg %p236
        %p431 = pneg %p260
        %p432 = pneg %p257
        %p433 = pneg %p286
        %p434 = pneg %p283
        %p435 = scmp.lt.s32.totalorder %s24, 1
        %s436 = scalar_select %p435, %s24, 1
        %s437 = smul.addr %s436, 2
        %s438 = smul.addr %s437, 8
        %s439 = scalar_lea.vmem %s11, %s438
        %p440 = scmp.lt.s32.totalorder %s24, 1
        %s441 = scalar_select %p440, %s24, 1
        %s442 = smul.addr %s441, 16
        %s443 = smul.addr %s442, 4
        %s444 = scalar_lea.vmem %s0, %s443
        %p445 = scmp.lt.s32.totalorder %s24, 1
        %s446 = scalar_select %p445, %s24, 1
        %s447 = smul.addr %s446, 16
        %s448 = smul.addr %s447, 4
        %s449 = scalar_lea.vmem %s1, %s448
        %p450 = scmp.lt.s32.totalorder %s24, 1
        %s451 = scalar_select %p450, %s24, 1
        %s452 = smul.addr %s451, 2
        %s453 = smul.addr %s452, 8
        %s454 = scalar_lea.vmem %s11, %s453
        %v456 = vld [vmem:[%s444] sm:$0xf]
        %v457 = vld [vmem:[%s444 + $0x4] sm:$0xf]
        %v458 = vld [vmem:[%s444 + $0x8] sm:$0xf]
        %v459 = vld [vmem:[%s444 + $0xc] sm:$0xf]
        %v460 = vld [vmem:[%s444 + $0x10] sm:$0xf]
        %v461 = vld [vmem:[%s444 + $0x14] sm:$0xf]
        %v462 = vld [vmem:[%s444 + $0x18] sm:$0xf]
        %v463 = vld [vmem:[%s444 + $0x1c] sm:$0xf]
        %v464 = vld [vmem:[%s444 + $0x20] sm:$0xf]
        %v465 = vld [vmem:[%s444 + $0x24] sm:$0xf]
        %v466 = vld [vmem:[%s444 + $0x28] sm:$0xf]
        %v467 = vld [vmem:[%s444 + $0x2c] sm:$0xf]
        %v468 = vld [vmem:[%s444 + $0x30] sm:$0xf]
        %v469 = vld [vmem:[%s444 + $0x34] sm:$0xf]
        %v470 = vld [vmem:[%s444 + $0x38] sm:$0xf]
        %v471 = vld [vmem:[%s444 + $0x3c] sm:$0xf]
        %v472 = vld [vmem:[%s449] sm:$0xf]
        %v473 = vld [vmem:[%s449 + $0x4] sm:$0xf]
        %v474 = vld [vmem:[%s449 + $0x8] sm:$0xf]
        %v475 = vld [vmem:[%s449 + $0xc] sm:$0xf]
        %v476 = vld [vmem:[%s449 + $0x10] sm:$0xf]
        %v477 = vld [vmem:[%s449 + $0x14] sm:$0xf]
        %v478 = vld [vmem:[%s449 + $0x18] sm:$0xf]
        %v479 = vld [vmem:[%s449 + $0x1c] sm:$0xf]
        %v480 = vld [vmem:[%s449 + $0x20] sm:$0xf]
        %v481 = vld [vmem:[%s449 + $0x24] sm:$0xf]
        %v482 = vld [vmem:[%s449 + $0x28] sm:$0xf]
        %v483 = vld [vmem:[%s449 + $0x2c] sm:$0xf]
        %v484 = vld [vmem:[%s449 + $0x30] sm:$0xf]
        %v485 = vld [vmem:[%s449 + $0x34] sm:$0xf]
        %v486 = vld [vmem:[%s449 + $0x38] sm:$0xf]
        %v487 = vld [vmem:[%s449 + $0x3c] sm:$0xf]
        %v488 = vld [vmem:[%s2] sm:$0x3]
        %v505 = vunpack.c.l.b16 %v472
        %v506 = vunpack.c.l.b16 %v473
        %v507 = vunpack.c.l.b16 %v474
        %v508 = vunpack.c.l.b16 %v475
        %v509 = vunpack.c.l.b16 %v476
        %v510 = vunpack.c.l.b16 %v477
        %v511 = vunpack.c.l.b16 %v478
        %v512 = vunpack.c.l.b16 %v479
        %v513 = vunpack.c.l.b16 %v480
        %v514 = vunpack.c.l.b16 %v481
        %v515 = vunpack.c.l.b16 %v482
        %v516 = vunpack.c.l.b16 %v483
        %v517 = vunpack.c.l.b16 %v484
        %v518 = vunpack.c.l.b16 %v485
        %v519 = vunpack.c.l.b16 %v486
        %v520 = vunpack.c.l.b16 %v487
        %v521 = vpack.c.b16 %v506, %v505
        %v522 = vpack.c.b16 %v508, %v507
        %v523 = vpack.c.b16 %v510, %v509
        %v524 = vpack.c.b16 %v512, %v511
        %v525 = vpack.c.b16 %v514, %v513
        %v526 = vpack.c.b16 %v516, %v515
        %v527 = vpack.c.b16 %v518, %v517
        %v528 = vpack.c.b16 %v520, %v519
        %vm529 = vcmask 31744
        %v531 = vsel %vm529, %v521, 0
        %v534 = vsel %vm529, %v522, 0
        %v537 = vsel %vm529, %v523, 0
        %v540 = vsel %vm529, %v524, 0
        %v543 = vsel %vm529, %v525, 0
        %v546 = vsel %vm529, %v526, 0
        %v549 = vsel %vm529, %v527, 0
        %v552 = vsel %vm529, %v528, 0
        %vm554 = vcmask 1041408
        %v556 = vsel %vm554, %v488, 0
        %558 = vmatpush.bf16.msra.mxu0 0
        %559 = vmatpush.bf16.msra.mxu0 0
        %560 = vmatpush.bf16.msra.mxu0 0
        %561 = vmatpush.bf16.msra.mxu0 0
        %562 = vmatpush.bf16.msra.mxu0 0
        %563 = vmatpush.bf16.msra.mxu0 0
        %564 = vmatpush.bf16.msra.mxu0 0
        %565 = vmatpush.bf16.msra.mxu0 %v556
        %566 = vmatmul.bf16.gmra.mxu0 %v531
        %v567 = vpop.f32.mrf.mxu0
        %v568 = vadd.f32 0.0, %v567
        %v569 = vpop.f32.mrf.mxu0
        %v570 = vadd.f32 0.0, %v569
        %571 = vmatmul.bf16.gmra.mxu0 %v534
        %v572 = vpop.f32.mrf.mxu0
        %v573 = vadd.f32 0.0, %v572
        %v574 = vpop.f32.mrf.mxu0
        %v575 = vadd.f32 0.0, %v574
        %576 = vmatmul.bf16.gmra.mxu0 %v537
        %v577 = vpop.f32.mrf.mxu0
        %v578 = vadd.f32 0.0, %v577
        %v579 = vpop.f32.mrf.mxu0
        %v580 = vadd.f32 0.0, %v579
        %581 = vmatmul.bf16.gmra.mxu0 %v540
        %v582 = vpop.f32.mrf.mxu0
        %v583 = vadd.f32 0.0, %v582
        %v584 = vpop.f32.mrf.mxu0
        %v585 = vadd.f32 0.0, %v584
        %586 = vmatmul.bf16.gmra.mxu0 %v543
        %v587 = vpop.f32.mrf.mxu0
        %v588 = vadd.f32 0.0, %v587
        %v589 = vpop.f32.mrf.mxu0
        %v590 = vadd.f32 0.0, %v589
        %591 = vmatmul.bf16.gmra.mxu0 %v546
        %v592 = vpop.f32.mrf.mxu0
        %v593 = vadd.f32 0.0, %v592
        %v594 = vpop.f32.mrf.mxu0
        %v595 = vadd.f32 0.0, %v594
        %596 = vmatmul.bf16.gmra.mxu0 %v549
        %v597 = vpop.f32.mrf.mxu0
        %v598 = vadd.f32 0.0, %v597
        %v599 = vpop.f32.mrf.mxu0
        %v600 = vadd.f32 0.0, %v599
        %601 = vmatmul.bf16.gmra.mxu0 %v552
        %v602 = vpop.f32.mrf.mxu0
        %v603 = vadd.f32 0.0, %v602
        %v604 = vpop.f32.mrf.mxu0
        %v605 = vadd.f32 0.0, %v604
        %606 = vdwg.mxu0
        %v607 = vpack.c.bf16 %v570, %v568
        %v608 = vpack.c.bf16 %v575, %v573
        %v609 = vpack.c.bf16 %v580, %v578
        %v610 = vpack.c.bf16 %v585, %v583
        %v611 = vpack.c.bf16 %v590, %v588
        %v612 = vpack.c.bf16 %v595, %v593
        %v613 = vpack.c.bf16 %v600, %v598
        %v614 = vpack.c.bf16 %v605, %v603
        %v631 = vunpack.c.l.b16 %v456
        %v632 = vunpack.c.l.b16 %v457
        %v633 = vunpack.c.l.b16 %v458
        %v634 = vunpack.c.l.b16 %v459
        %v635 = vunpack.c.l.b16 %v460
        %v636 = vunpack.c.l.b16 %v461
        %v637 = vunpack.c.l.b16 %v462
        %v638 = vunpack.c.l.b16 %v463
        %v639 = vunpack.c.l.b16 %v464
        %v640 = vunpack.c.l.b16 %v465
        %v641 = vunpack.c.l.b16 %v466
        %v642 = vunpack.c.l.b16 %v467
        %v643 = vunpack.c.l.b16 %v468
        %v644 = vunpack.c.l.b16 %v469
        %v645 = vunpack.c.l.b16 %v470
        %v646 = vunpack.c.l.b16 %v471
        %v647 = vpack.c.b16 %v632, %v631
        %v648 = vpack.c.b16 %v634, %v633
        %v649 = vpack.c.b16 %v636, %v635
        %v650 = vpack.c.b16 %v638, %v637
        %v651 = vpack.c.b16 %v640, %v639
        %v652 = vpack.c.b16 %v642, %v641
        %v653 = vpack.c.b16 %v644, %v643
        %v654 = vpack.c.b16 %v646, %v645
        %663 = vxpose.xlu0.c.b16.start [1/8] %v647, 128
        %664 = vxpose.xlu0.c.b16.cont [2/8] %v648, 128
        %665 = vxpose.xlu0.c.b16.cont [3/8] %v649, 128
        %666 = vxpose.xlu0.c.b16.cont [4/8] %v650, 128
        %667 = vxpose.xlu0.c.b16.cont [5/8] %v651, 128
        %668 = vxpose.xlu0.c.b16.cont [6/8] %v652, 128
        %669 = vxpose.xlu0.c.b16.cont [7/8] %v653, 128
        %670 = vxpose.xlu0.c.b16.end [8/8] %v654, 128
        %v671 = vpop.trf.xlu0
        %v672 = vpop.trf.xlu0
        %v673 = vpop.trf.xlu0
        %v674 = vpop.trf.xlu0
        %v675 = vpop.trf.xlu0
        %v676 = vpop.trf.xlu0
        %v677 = vpop.trf.xlu0
        %v678 = vpop.trf.xlu0
        %687 = vrot.lane.b32.xlu0 %v607, 96
        %v688 = vpop.permute.xlu0 %687
        %689 = vrot.lane.b32.xlu0 %v608, 96
        %v690 = vpop.permute.xlu0 %689
        %691 = vrot.lane.b32.xlu0 %v609, 96
        %v692 = vpop.permute.xlu0 %691
        %693 = vrot.lane.b32.xlu0 %v610, 96
        %v694 = vpop.permute.xlu0 %693
        %695 = vrot.lane.b32.xlu0 %v611, 96
        %v696 = vpop.permute.xlu0 %695
        %697 = vrot.lane.b32.xlu0 %v612, 96
        %v698 = vpop.permute.xlu0 %697
        %699 = vrot.lane.b32.xlu0 %v613, 96
        %v700 = vpop.permute.xlu0 %699
        %701 = vrot.lane.b32.xlu0 %v614, 96
        %v702 = vpop.permute.xlu0 %701
        %711 = vmatpush.bf16.msra.mxu0 %v702
        %712 = vmatpush.bf16.msra.mxu0 %v700
        %713 = vmatpush.bf16.msra.mxu0 %v698
        %714 = vmatpush.bf16.msra.mxu0 %v696
        %715 = vmatpush.bf16.msra.mxu0 %v694
        %716 = vmatpush.bf16.msra.mxu0 %v692
        %717 = vmatpush.bf16.msra.mxu0 %v690
        %718 = vmatpush.bf16.msra.mxu0 %v688
        %719 = vmatmul.bf16.gmra.mxu0 %v671
        %v720 = vpop.f32.mrf.mxu0
        %v721 = vadd.f32 0.0, %v720
        %v722 = vpop.f32.mrf.mxu0
        %v723 = vadd.f32 0.0, %v722
        %724 = vmatmul.bf16.gmra.mxu0 %v672
        %v725 = vpop.f32.mrf.mxu0
        %v726 = vadd.f32 0.0, %v725
        %v727 = vpop.f32.mrf.mxu0
        %v728 = vadd.f32 0.0, %v727
        %729 = vmatmul.bf16.gmra.mxu0 %v673
        %v730 = vpop.f32.mrf.mxu0
        %v731 = vadd.f32 0.0, %v730
        %v732 = vpop.f32.mrf.mxu0
        %v733 = vadd.f32 0.0, %v732
        %734 = vmatmul.bf16.gmra.mxu0 %v674
        %v735 = vpop.f32.mrf.mxu0
        %v736 = vadd.f32 0.0, %v735
        %v737 = vpop.f32.mrf.mxu0
        %v738 = vadd.f32 0.0, %v737
        %739 = vmatmul.bf16.gmra.mxu0 %v675
        %v740 = vpop.f32.mrf.mxu0
        %v741 = vadd.f32 0.0, %v740
        %v742 = vpop.f32.mrf.mxu0
        %v743 = vadd.f32 0.0, %v742
        %744 = vmatmul.bf16.gmra.mxu0 %v676
        %v745 = vpop.f32.mrf.mxu0
        %v746 = vadd.f32 0.0, %v745
        %v747 = vpop.f32.mrf.mxu0
        %v748 = vadd.f32 0.0, %v747
        %749 = vmatmul.bf16.gmra.mxu0 %v677
        %v750 = vpop.f32.mrf.mxu0
        %v751 = vadd.f32 0.0, %v750
        %v752 = vpop.f32.mrf.mxu0
        %v753 = vadd.f32 0.0, %v752
        %754 = vmatmul.bf16.gmra.mxu0 %v678
        %v755 = vpop.f32.mrf.mxu0
        %v756 = vadd.f32 0.0, %v755
        %v757 = vpop.f32.mrf.mxu0
        %v758 = vadd.f32 0.0, %v757
        %759 = vdwg.mxu0
        %760 = vmatpush.bf16.msra.mxu0 %v614
        %761 = vmatpush.bf16.msra.mxu0 %v613
        %762 = vmatpush.bf16.msra.mxu0 %v612
        %763 = vmatpush.bf16.msra.mxu0 %v611
        %764 = vmatpush.bf16.msra.mxu0 %v610
        %765 = vmatpush.bf16.msra.mxu0 %v609
        %766 = vmatpush.bf16.msra.mxu0 %v608
        %767 = vmatpush.bf16.msra.mxu0 %v607
        %768 = vmatmul.bf16.gmra.mxu0 %v647
        %v769 = vpop.f32.mrf.mxu0
        %v770 = vadd.f32 %v721, %v769
        %v771 = vpop.f32.mrf.mxu0
        %v772 = vadd.f32 %v723, %v771
        %773 = vmatmul.bf16.gmra.mxu0 %v648
        %v774 = vpop.f32.mrf.mxu0
        %v775 = vadd.f32 %v726, %v774
        %v776 = vpop.f32.mrf.mxu0
        %v777 = vadd.f32 %v728, %v776
        %778 = vmatmul.bf16.gmra.mxu0 %v649
        %v779 = vpop.f32.mrf.mxu0
        %v780 = vadd.f32 %v731, %v779
        %v781 = vpop.f32.mrf.mxu0
        %v782 = vadd.f32 %v733, %v781
        %783 = vmatmul.bf16.gmra.mxu0 %v650
        %v784 = vpop.f32.mrf.mxu0
        %v785 = vadd.f32 %v736, %v784
        %v786 = vpop.f32.mrf.mxu0
        %v787 = vadd.f32 %v738, %v786
        %788 = vmatmul.bf16.gmra.mxu0 %v651
        %v789 = vpop.f32.mrf.mxu0
        %v790 = vadd.f32 %v741, %v789
        %v791 = vpop.f32.mrf.mxu0
        %v792 = vadd.f32 %v743, %v791
        %793 = vmatmul.bf16.gmra.mxu0 %v652
        %v794 = vpop.f32.mrf.mxu0
        %v795 = vadd.f32 %v746, %v794
        %v796 = vpop.f32.mrf.mxu0
        %v797 = vadd.f32 %v748, %v796
        %798 = vmatmul.bf16.gmra.mxu0 %v653
        %v799 = vpop.f32.mrf.mxu0
        %v800 = vadd.f32 %v751, %v799
        %v801 = vpop.f32.mrf.mxu0
        %v802 = vadd.f32 %v753, %v801
        %803 = vmatmul.bf16.gmra.mxu0 %v654
        %v804 = vpop.f32.mrf.mxu0
        %v805 = vadd.f32 %v756, %v804
        %v806 = vpop.f32.mrf.mxu0
        %v807 = vadd.f32 %v758, %v806
        %808 = vdwg.mxu0
        %v809 = vld [vmem:[%s3] sm:$0x1]
        %v811 = vperm.slane %v809, 0
        %v813 = vadd.f32 %v770, %v811
        %v814 = vadd.f32 %v772, %v811
        %v815 = vadd.f32 %v775, %v811
        %v816 = vadd.f32 %v777, %v811
        %v817 = vadd.f32 %v780, %v811
        %v818 = vadd.f32 %v782, %v811
        %v819 = vadd.f32 %v785, %v811
        %v820 = vadd.f32 %v787, %v811
        %v821 = vadd.f32 %v790, %v811
        %v822 = vadd.f32 %v792, %v811
        %v823 = vadd.f32 %v795, %v811
        %v824 = vadd.f32 %v797, %v811
        %v825 = vadd.f32 %v800, %v811
        %v826 = vadd.f32 %v802, %v811
        %v827 = vadd.f32 %v805, %v811
        %v828 = vadd.f32 %v807, %v811
        %v829 = vpack.c.bf16 %v814, %v813
        %v830 = vpack.c.bf16 %v816, %v815
        %v831 = vpack.c.bf16 %v818, %v817
        %v832 = vpack.c.bf16 %v820, %v819
        %v833 = vpack.c.bf16 %v822, %v821
        %v834 = vpack.c.bf16 %v824, %v823
        %v835 = vpack.c.bf16 %v826, %v825
        %v836 = vpack.c.bf16 %v828, %v827
        %v837 = vld [vmem:[%s4] sm:$0xf]
        %v838 = vld [vmem:[%s4 + $0x4] sm:$0xf]
        %v839 = vld [vmem:[%s4 + $0x8] sm:$0xf]
        %v840 = vld [vmem:[%s4 + $0xc] sm:$0xf]
        %v845 = vunpack.c.l.b16 %v837
        %v846 = vunpack.c.l.b16 %v838
        %v847 = vunpack.c.l.b16 %v839
        %v848 = vunpack.c.l.b16 %v840
        %v849 = vpack.c.b16 %v846, %v845
        %v850 = vpack.c.b16 %v848, %v847
        %vm853 = vcmask 261120
        %v855 = vsel %vm853, %v829, 0
        %v858 = vsel %vm853, %v830, 0
        %v861 = vsel %vm853, %v831, 0
        %v864 = vsel %vm853, %v832, 0
        %v867 = vsel %vm853, %v833, 0
        %v870 = vsel %vm853, %v834, 0
        %v873 = vsel %vm853, %v835, 0
        %v876 = vsel %vm853, %v836, 0
        %878 = vmatpush.bf16.msra.mxu0 0
        %879 = vmatpush.bf16.msra.mxu0 0
        %880 = vmatpush.bf16.msra.mxu0 0
        %881 = vmatpush.bf16.msra.mxu0 0
        %882 = vmatpush.bf16.msra.mxu0 0
        %883 = vmatpush.bf16.msra.mxu0 0
        %884 = vmatpush.bf16.msra.mxu0 %v850
        %885 = vmatpush.bf16.msra.mxu0 %v849
        %886 = vmatmul.bf16.gmra.mxu0 %v855
        %v887 = vpop.f32.mrf.mxu0
        %v888 = vadd.f32 0.0, %v887
        %v889 = vpop.f32.mrf.mxu0
        %v890 = vadd.f32 0.0, %v889
        %891 = vmatmul.bf16.gmra.mxu0 %v858
        %v892 = vpop.f32.mrf.mxu0
        %v893 = vadd.f32 0.0, %v892
        %v894 = vpop.f32.mrf.mxu0
        %v895 = vadd.f32 0.0, %v894
        %896 = vmatmul.bf16.gmra.mxu0 %v861
        %v897 = vpop.f32.mrf.mxu0
        %v898 = vadd.f32 0.0, %v897
        %v899 = vpop.f32.mrf.mxu0
        %v900 = vadd.f32 0.0, %v899
        %901 = vmatmul.bf16.gmra.mxu0 %v864
        %v902 = vpop.f32.mrf.mxu0
        %v903 = vadd.f32 0.0, %v902
        %v904 = vpop.f32.mrf.mxu0
        %v905 = vadd.f32 0.0, %v904
        %906 = vmatmul.bf16.gmra.mxu0 %v867
        %v907 = vpop.f32.mrf.mxu0
        %v908 = vadd.f32 0.0, %v907
        %v909 = vpop.f32.mrf.mxu0
        %v910 = vadd.f32 0.0, %v909
        %911 = vmatmul.bf16.gmra.mxu0 %v870
        %v912 = vpop.f32.mrf.mxu0
        %v913 = vadd.f32 0.0, %v912
        %v914 = vpop.f32.mrf.mxu0
        %v915 = vadd.f32 0.0, %v914
        %916 = vmatmul.bf16.gmra.mxu0 %v873
        %v917 = vpop.f32.mrf.mxu0
        %v918 = vadd.f32 0.0, %v917
        %v919 = vpop.f32.mrf.mxu0
        %v920 = vadd.f32 0.0, %v919
        %921 = vmatmul.bf16.gmra.mxu0 %v876
        %v922 = vpop.f32.mrf.mxu0
        %v923 = vadd.f32 0.0, %v922
        %v924 = vpop.f32.mrf.mxu0
        %v925 = vadd.f32 0.0, %v924
        %926 = vdwg.mxu0
        %v927 = vpack.c.bf16 %v890, %v888
        %v928 = vpack.c.bf16 %v895, %v893
        %v929 = vpack.c.bf16 %v900, %v898
        %v930 = vpack.c.bf16 %v905, %v903
        %v931 = vpack.c.bf16 %v910, %v908
        %v932 = vpack.c.bf16 %v915, %v913
        %v933 = vpack.c.bf16 %v920, %v918
        %v934 = vpack.c.bf16 %v925, %v923
        %943 = vrot.lane.b32.xlu0 %v927, 96
        %v944 = vpop.permute.xlu0 %943
        %945 = vrot.lane.b32.xlu0 %v928, 96
        %v946 = vpop.permute.xlu0 %945
        %947 = vrot.lane.b32.xlu0 %v929, 96
        %v948 = vpop.permute.xlu0 %947
        %949 = vrot.lane.b32.xlu0 %v930, 96
        %v950 = vpop.permute.xlu0 %949
        %951 = vrot.lane.b32.xlu0 %v931, 96
        %v952 = vpop.permute.xlu0 %951
        %953 = vrot.lane.b32.xlu0 %v932, 96
        %v954 = vpop.permute.xlu0 %953
        %955 = vrot.lane.b32.xlu0 %v933, 96
        %v956 = vpop.permute.xlu0 %955
        %957 = vrot.lane.b32.xlu0 %v934, 96
        %v958 = vpop.permute.xlu0 %957
        %967 = vmatpush.bf16.msra.mxu0 %v958
        %968 = vmatpush.bf16.msra.mxu0 %v956
        %969 = vmatpush.bf16.msra.mxu0 %v954
        %970 = vmatpush.bf16.msra.mxu0 %v952
        %971 = vmatpush.bf16.msra.mxu0 %v950
        %972 = vmatpush.bf16.msra.mxu0 %v948
        %973 = vmatpush.bf16.msra.mxu0 %v946
        %974 = vmatpush.bf16.msra.mxu0 %v944
        %975 = vmatmul.bf16.gmra.mxu0 %v671
        %v976 = vpop.f32.mrf.mxu0
        %v977 = vadd.f32 0.0, %v976
        %v978 = vpop.f32.mrf.mxu0
        %v979 = vadd.f32 0.0, %v978
        %980 = vmatmul.bf16.gmra.mxu0 %v672
        %v981 = vpop.f32.mrf.mxu0
        %v982 = vadd.f32 0.0, %v981
        %v983 = vpop.f32.mrf.mxu0
        %v984 = vadd.f32 0.0, %v983
        %985 = vmatmul.bf16.gmra.mxu0 %v673
        %v986 = vpop.f32.mrf.mxu0
        %v987 = vadd.f32 0.0, %v986
        %v988 = vpop.f32.mrf.mxu0
        %v989 = vadd.f32 0.0, %v988
        %990 = vmatmul.bf16.gmra.mxu0 %v674
        %v991 = vpop.f32.mrf.mxu0
        %v992 = vadd.f32 0.0, %v991
        %v993 = vpop.f32.mrf.mxu0
        %v994 = vadd.f32 0.0, %v993
        %995 = vmatmul.bf16.gmra.mxu0 %v675
        %v996 = vpop.f32.mrf.mxu0
        %v997 = vadd.f32 0.0, %v996
        %v998 = vpop.f32.mrf.mxu0
        %v999 = vadd.f32 0.0, %v998
        %1000 = vmatmul.bf16.gmra.mxu0 %v676
        %v1001 = vpop.f32.mrf.mxu0
        %v1002 = vadd.f32 0.0, %v1001
        %v1003 = vpop.f32.mrf.mxu0
        %v1004 = vadd.f32 0.0, %v1003
        %1005 = vmatmul.bf16.gmra.mxu0 %v677
        %v1006 = vpop.f32.mrf.mxu0
        %v1007 = vadd.f32 0.0, %v1006
        %v1008 = vpop.f32.mrf.mxu0
        %v1009 = vadd.f32 0.0, %v1008
        %1010 = vmatmul.bf16.gmra.mxu0 %v678
        %v1011 = vpop.f32.mrf.mxu0
        %v1012 = vadd.f32 0.0, %v1011
        %v1013 = vpop.f32.mrf.mxu0
        %v1014 = vadd.f32 0.0, %v1013
        %1015 = vdwg.mxu0
        %1016 = vmatpush.bf16.msra.mxu0 %v934
        %1017 = vmatpush.bf16.msra.mxu0 %v933
        %1018 = vmatpush.bf16.msra.mxu0 %v932
        %1019 = vmatpush.bf16.msra.mxu0 %v931
        %1020 = vmatpush.bf16.msra.mxu0 %v930
        %1021 = vmatpush.bf16.msra.mxu0 %v929
        %1022 = vmatpush.bf16.msra.mxu0 %v928
        %1023 = vmatpush.bf16.msra.mxu0 %v927
        %1024 = vmatmul.bf16.gmra.mxu0 %v647
        %v1025 = vpop.f32.mrf.mxu0
        %v1026 = vadd.f32 %v977, %v1025
        %v1027 = vpop.f32.mrf.mxu0
        %v1028 = vadd.f32 %v979, %v1027
        %1029 = vmatmul.bf16.gmra.mxu0 %v648
        %v1030 = vpop.f32.mrf.mxu0
        %v1031 = vadd.f32 %v982, %v1030
        %v1032 = vpop.f32.mrf.mxu0
        %v1033 = vadd.f32 %v984, %v1032
        %1034 = vmatmul.bf16.gmra.mxu0 %v649
        %v1035 = vpop.f32.mrf.mxu0
        %v1036 = vadd.f32 %v987, %v1035
        %v1037 = vpop.f32.mrf.mxu0
        %v1038 = vadd.f32 %v989, %v1037
        %1039 = vmatmul.bf16.gmra.mxu0 %v650
        %v1040 = vpop.f32.mrf.mxu0
        %v1041 = vadd.f32 %v992, %v1040
        %v1042 = vpop.f32.mrf.mxu0
        %v1043 = vadd.f32 %v994, %v1042
        %1044 = vmatmul.bf16.gmra.mxu0 %v651
        %v1045 = vpop.f32.mrf.mxu0
        %v1046 = vadd.f32 %v997, %v1045
        %v1047 = vpop.f32.mrf.mxu0
        %v1048 = vadd.f32 %v999, %v1047
        %1049 = vmatmul.bf16.gmra.mxu0 %v652
        %v1050 = vpop.f32.mrf.mxu0
        %v1051 = vadd.f32 %v1002, %v1050
        %v1052 = vpop.f32.mrf.mxu0
        %v1053 = vadd.f32 %v1004, %v1052
        %1054 = vmatmul.bf16.gmra.mxu0 %v653
        %v1055 = vpop.f32.mrf.mxu0
        %v1056 = vadd.f32 %v1007, %v1055
        %v1057 = vpop.f32.mrf.mxu0
        %v1058 = vadd.f32 %v1009, %v1057
        %1059 = vmatmul.bf16.gmra.mxu0 %v654
        %v1060 = vpop.f32.mrf.mxu0
        %v1061 = vadd.f32 %v1012, %v1060
        %v1062 = vpop.f32.mrf.mxu0
        %v1063 = vadd.f32 %v1014, %v1062
        %1064 = vdwg.mxu0
        %v1065 = vld [vmem:[#allocation3] sm:$0x1]
        %v1067 = vperm.slane %v1065, 0
        %v1069 = vadd.f32 %v1026, %v1067
        %v1070 = vadd.f32 %v1028, %v1067
        %v1071 = vadd.f32 %v1031, %v1067
        %v1072 = vadd.f32 %v1033, %v1067
        %v1073 = vadd.f32 %v1036, %v1067
        %v1074 = vadd.f32 %v1038, %v1067
        %v1075 = vadd.f32 %v1041, %v1067
        %v1076 = vadd.f32 %v1043, %v1067
        %v1077 = vadd.f32 %v1046, %v1067
        %v1078 = vadd.f32 %v1048, %v1067
        %v1079 = vadd.f32 %v1051, %v1067
        %v1080 = vadd.f32 %v1053, %v1067
        %v1081 = vadd.f32 %v1056, %v1067
        %v1082 = vadd.f32 %v1058, %v1067
        %v1083 = vadd.f32 %v1061, %v1067
        %v1084 = vadd.f32 %v1063, %v1067
        %v1085 = vpack.c.bf16 %v1070, %v1069
        %v1086 = vpack.c.bf16 %v1072, %v1071
        %v1087 = vpack.c.bf16 %v1074, %v1073
        %v1088 = vpack.c.bf16 %v1076, %v1075
        %v1089 = vpack.c.bf16 %v1078, %v1077
        %v1090 = vpack.c.bf16 %v1080, %v1079
        %v1091 = vpack.c.bf16 %v1082, %v1081
        %v1092 = vpack.c.bf16 %v1084, %v1083
        %v1093 = vld [vmem:[#allocation5] sm:$0xf]
        %v1094 = vld [vmem:[#allocation5 + $0x4] sm:$0xf]
        %v1095 = vld [vmem:[#allocation5 + $0x8] sm:$0xf]
        %v1096 = vld [vmem:[#allocation5 + $0xc] sm:$0xf]
        %v1097 = vld [vmem:[%s8] sm:$0x1]
        %v1099 = vperm.slane %v1097, 0
        %v1105 = vunpack.c.l.b16 %v1093
        %v1106 = vunpack.c.l.b16 %v1094
        %v1107 = vunpack.c.l.b16 %v1095
        %v1108 = vunpack.c.l.b16 %v1096
        %v1109 = vpack.c.b16 %v1106, %v1105
        %v1110 = vpack.c.b16 %v1108, %v1107
        %v1114 = vsel %vm853, %v1085, 0
        %v1117 = vsel %vm853, %v1086, 0
        %v1120 = vsel %vm853, %v1087, 0
        %v1123 = vsel %vm853, %v1088, 0
        %v1126 = vsel %vm853, %v1089, 0
        %v1129 = vsel %vm853, %v1090, 0
        %v1132 = vsel %vm853, %v1091, 0
        %v1135 = vsel %vm853, %v1092, 0
        %1137 = vmatpush.bf16.msra.mxu0 0
        %1138 = vmatpush.bf16.msra.mxu0 0
        %1139 = vmatpush.bf16.msra.mxu0 0
        %1140 = vmatpush.bf16.msra.mxu0 0
        %1141 = vmatpush.bf16.msra.mxu0 0
        %1142 = vmatpush.bf16.msra.mxu0 0
        %1143 = vmatpush.bf16.msra.mxu0 %v1110
        %1144 = vmatpush.bf16.msra.mxu0 %v1109
        %1145 = vmatmul.bf16.gmra.mxu0 %v1114
        %v1146 = vpop.f32.mrf.mxu0
        %v1147 = vadd.f32 %v1099, %v1146
        %v1148 = vpop.f32.mrf.mxu0
        %v1149 = vadd.f32 %v1099, %v1148
        %1150 = vmatmul.bf16.gmra.mxu0 %v1117
        %v1151 = vpop.f32.mrf.mxu0
        %v1152 = vadd.f32 %v1099, %v1151
        %v1153 = vpop.f32.mrf.mxu0
        %v1154 = vadd.f32 %v1099, %v1153
        %1155 = vmatmul.bf16.gmra.mxu0 %v1120
        %v1156 = vpop.f32.mrf.mxu0
        %v1157 = vadd.f32 %v1099, %v1156
        %v1158 = vpop.f32.mrf.mxu0
        %v1159 = vadd.f32 %v1099, %v1158
        %1160 = vmatmul.bf16.gmra.mxu0 %v1123
        %v1161 = vpop.f32.mrf.mxu0
        %v1162 = vadd.f32 %v1099, %v1161
        %v1163 = vpop.f32.mrf.mxu0
        %v1164 = vadd.f32 %v1099, %v1163
        %1165 = vmatmul.bf16.gmra.mxu0 %v1126
        %v1166 = vpop.f32.mrf.mxu0
        %v1167 = vadd.f32 %v1099, %v1166
        %v1168 = vpop.f32.mrf.mxu0
        %v1169 = vadd.f32 %v1099, %v1168
        %1170 = vmatmul.bf16.gmra.mxu0 %v1129
        %v1171 = vpop.f32.mrf.mxu0
        %v1172 = vadd.f32 %v1099, %v1171
        %v1173 = vpop.f32.mrf.mxu0
        %v1174 = vadd.f32 %v1099, %v1173
        %1175 = vmatmul.bf16.gmra.mxu0 %v1132
        %v1176 = vpop.f32.mrf.mxu0
        %v1177 = vadd.f32 %v1099, %v1176
        %v1178 = vpop.f32.mrf.mxu0
        %v1179 = vadd.f32 %v1099, %v1178
        %1180 = vmatmul.bf16.gmra.mxu0 %v1135
        %v1181 = vpop.f32.mrf.mxu0
        %v1182 = vadd.f32 %v1099, %v1181
        %v1183 = vpop.f32.mrf.mxu0
        %v1184 = vadd.f32 %v1099, %v1183
        %1185 = vdwg.mxu0
        %v1186 = vrot.slane %v1152, 4
        %vm1187 = vcmask 1047556
        %v1188 = vsel %vm1187, %v1186, %v1147
        %v1189 = vrot.slane %v1147, 4
        %v1190 = vsel %vm1187, %v1152, %v1189
        %v1192 = vunpack.c.l.s4 1983009808
        %v1193 = vunpack.c.0.s8 %v1192
        %v1194 = vperm.slane %v1188, %v1193
        %v1196 = vunpack.c.l.s4 1983009808
        %v1197 = vunpack.c.0.s8 %v1196
        %v1198 = vperm.slane %v1190, %v1197
        %v1199 = vrot.slane %v1154, 4
        %v1200 = vsel %vm1187, %v1199, %v1149
        %v1201 = vrot.slane %v1149, 4
        %v1202 = vsel %vm1187, %v1154, %v1201
        %v1204 = vunpack.c.l.s4 1983009808
        %v1205 = vunpack.c.0.s8 %v1204
        %v1206 = vperm.slane %v1200, %v1205
        %v1208 = vunpack.c.l.s4 1983009808
        %v1209 = vunpack.c.0.s8 %v1208
        %v1210 = vperm.slane %v1202, %v1209
        %v1211 = vrot.slane %v1162, 4
        %v1212 = vsel %vm1187, %v1211, %v1157
        %v1213 = vrot.slane %v1157, 4
        %v1214 = vsel %vm1187, %v1162, %v1213
        %v1216 = vunpack.c.l.s4 1983009808
        %v1217 = vunpack.c.0.s8 %v1216
        %v1218 = vperm.slane %v1212, %v1217
        %v1220 = vunpack.c.l.s4 1983009808
        %v1221 = vunpack.c.0.s8 %v1220
        %v1222 = vperm.slane %v1214, %v1221
        %v1223 = vrot.slane %v1164, 4
        %v1224 = vsel %vm1187, %v1223, %v1159
        %v1225 = vrot.slane %v1159, 4
        %v1226 = vsel %vm1187, %v1164, %v1225
        %v1228 = vunpack.c.l.s4 1983009808
        %v1229 = vunpack.c.0.s8 %v1228
        %v1230 = vperm.slane %v1224, %v1229
        %v1232 = vunpack.c.l.s4 1983009808
        %v1233 = vunpack.c.0.s8 %v1232
        %v1234 = vperm.slane %v1226, %v1233
        %v1235 = vrot.slane %v1206, 4
        %v1236 = vsel %vm1187, %v1235, %v1194
        %v1237 = vrot.slane %v1194, 4
        %v1238 = vsel %vm1187, %v1206, %v1237
        %v1240 = vunpack.c.l.s4 1934713408
        %v1241 = vunpack.c.0.s8 %v1240
        %v1242 = vperm.slane %v1236, %v1241
        %v1244 = vunpack.c.l.s4 1934713408
        %v1245 = vunpack.c.0.s8 %v1244
        %v1246 = vperm.slane %v1238, %v1245
        %v1247 = vrot.slane %v1210, 4
        %v1248 = vsel %vm1187, %v1247, %v1198
        %v1249 = vrot.slane %v1198, 4
        %v1250 = vsel %vm1187, %v1210, %v1249
        %v1252 = vunpack.c.l.s4 1934713408
        %v1253 = vunpack.c.0.s8 %v1252
        %v1254 = vperm.slane %v1248, %v1253
        %v1256 = vunpack.c.l.s4 1934713408
        %v1257 = vunpack.c.0.s8 %v1256
        %v1258 = vperm.slane %v1250, %v1257
        %v1259 = vrot.slane %v1230, 4
        %v1260 = vsel %vm1187, %v1259, %v1218
        %v1261 = vrot.slane %v1218, 4
        %v1262 = vsel %vm1187, %v1230, %v1261
        %v1264 = vunpack.c.l.s4 1934713408
        %v1265 = vunpack.c.0.s8 %v1264
        %v1266 = vperm.slane %v1260, %v1265
        %v1268 = vunpack.c.l.s4 1934713408
        %v1269 = vunpack.c.0.s8 %v1268
        %v1270 = vperm.slane %v1262, %v1269
        %v1271 = vrot.slane %v1234, 4
        %v1272 = vsel %vm1187, %v1271, %v1222
        %v1273 = vrot.slane %v1222, 4
        %v1274 = vsel %vm1187, %v1234, %v1273
        %v1276 = vunpack.c.l.s4 1934713408
        %v1277 = vunpack.c.0.s8 %v1276
        %v1278 = vperm.slane %v1272, %v1277
        %v1280 = vunpack.c.l.s4 1934713408
        %v1281 = vunpack.c.0.s8 %v1280
        %v1282 = vperm.slane %v1274, %v1281
        %v1283 = vrot.slane %v1266, 4
        %v1284 = vsel %vm1187, %v1283, %v1242
        %v1285 = vrot.slane %v1242, 4
        %v1286 = vsel %vm1187, %v1266, %v1285
        %v1287 = vrot.slane %v1270, 4
        %v1288 = vsel %vm1187, %v1287, %v1246
        %v1289 = vrot.slane %v1246, 4
        %v1290 = vsel %vm1187, %v1270, %v1289
        %v1291 = vrot.slane %v1278, 4
        %v1292 = vsel %vm1187, %v1291, %v1254
        %v1293 = vrot.slane %v1254, 4
        %v1294 = vsel %vm1187, %v1278, %v1293
        %v1295 = vrot.slane %v1282, 4
        %v1296 = vsel %vm1187, %v1295, %v1258
        %v1297 = vrot.slane %v1258, 4
        %v1298 = vsel %vm1187, %v1282, %v1297
        %v1299 = vrot.slane %v1172, 4
        %v1300 = vsel %vm1187, %v1299, %v1167
        %v1301 = vrot.slane %v1167, 4
        %v1302 = vsel %vm1187, %v1172, %v1301
        %v1304 = vunpack.c.l.s4 1983009808
        %v1305 = vunpack.c.0.s8 %v1304
        %v1306 = vperm.slane %v1300, %v1305
        %v1308 = vunpack.c.l.s4 1983009808
        %v1309 = vunpack.c.0.s8 %v1308
        %v1310 = vperm.slane %v1302, %v1309
        %v1311 = vrot.slane %v1174, 4
        %v1312 = vsel %vm1187, %v1311, %v1169
        %v1313 = vrot.slane %v1169, 4
        %v1314 = vsel %vm1187, %v1174, %v1313
        %v1316 = vunpack.c.l.s4 1983009808
        %v1317 = vunpack.c.0.s8 %v1316
        %v1318 = vperm.slane %v1312, %v1317
        %v1320 = vunpack.c.l.s4 1983009808
        %v1321 = vunpack.c.0.s8 %v1320
        %v1322 = vperm.slane %v1314, %v1321
        %v1323 = vrot.slane %v1182, 4
        %v1324 = vsel %vm1187, %v1323, %v1177
        %v1325 = vrot.slane %v1177, 4
        %v1326 = vsel %vm1187, %v1182, %v1325
        %v1328 = vunpack.c.l.s4 1983009808
        %v1329 = vunpack.c.0.s8 %v1328
        %v1330 = vperm.slane %v1324, %v1329
        %v1332 = vunpack.c.l.s4 1983009808
        %v1333 = vunpack.c.0.s8 %v1332
        %v1334 = vperm.slane %v1326, %v1333
        %v1335 = vrot.slane %v1184, 4
        %v1336 = vsel %vm1187, %v1335, %v1179
        %v1337 = vrot.slane %v1179, 4
        %v1338 = vsel %vm1187, %v1184, %v1337
        %v1340 = vunpack.c.l.s4 1983009808
        %v1341 = vunpack.c.0.s8 %v1340
        %v1342 = vperm.slane %v1336, %v1341
        %v1344 = vunpack.c.l.s4 1983009808
        %v1345 = vunpack.c.0.s8 %v1344
        %v1346 = vperm.slane %v1338, %v1345
        %v1347 = vrot.slane %v1318, 4
        %v1348 = vsel %vm1187, %v1347, %v1306
        %v1349 = vrot.slane %v1306, 4
        %v1350 = vsel %vm1187, %v1318, %v1349
        %v1352 = vunpack.c.l.s4 1934713408
        %v1353 = vunpack.c.0.s8 %v1352
        %v1354 = vperm.slane %v1348, %v1353
        %v1356 = vunpack.c.l.s4 1934713408
        %v1357 = vunpack.c.0.s8 %v1356
        %v1358 = vperm.slane %v1350, %v1357
        %v1359 = vrot.slane %v1322, 4
        %v1360 = vsel %vm1187, %v1359, %v1310
        %v1361 = vrot.slane %v1310, 4
        %v1362 = vsel %vm1187, %v1322, %v1361
        %v1364 = vunpack.c.l.s4 1934713408
        %v1365 = vunpack.c.0.s8 %v1364
        %v1366 = vperm.slane %v1360, %v1365
        %v1368 = vunpack.c.l.s4 1934713408
        %v1369 = vunpack.c.0.s8 %v1368
        %v1370 = vperm.slane %v1362, %v1369
        %v1371 = vrot.slane %v1342, 4
        %v1372 = vsel %vm1187, %v1371, %v1330
        %v1373 = vrot.slane %v1330, 4
        %v1374 = vsel %vm1187, %v1342, %v1373
        %v1376 = vunpack.c.l.s4 1934713408
        %v1377 = vunpack.c.0.s8 %v1376
        %v1378 = vperm.slane %v1372, %v1377
        %v1380 = vunpack.c.l.s4 1934713408
        %v1381 = vunpack.c.0.s8 %v1380
        %v1382 = vperm.slane %v1374, %v1381
        %v1383 = vrot.slane %v1346, 4
        %v1384 = vsel %vm1187, %v1383, %v1334
        %v1385 = vrot.slane %v1334, 4
        %v1386 = vsel %vm1187, %v1346, %v1385
        %v1388 = vunpack.c.l.s4 1934713408
        %v1389 = vunpack.c.0.s8 %v1388
        %v1390 = vperm.slane %v1384, %v1389
        %v1392 = vunpack.c.l.s4 1934713408
        %v1393 = vunpack.c.0.s8 %v1392
        %v1394 = vperm.slane %v1386, %v1393
        %v1395 = vrot.slane %v1378, 4
        %v1396 = vsel %vm1187, %v1395, %v1354
        %v1397 = vrot.slane %v1354, 4
        %v1398 = vsel %vm1187, %v1378, %v1397
        %v1399 = vrot.slane %v1382, 4
        %v1400 = vsel %vm1187, %v1399, %v1358
        %v1401 = vrot.slane %v1358, 4
        %v1402 = vsel %vm1187, %v1382, %v1401
        %v1403 = vrot.slane %v1390, 4
        %v1404 = vsel %vm1187, %v1403, %v1366
        %v1405 = vrot.slane %v1366, 4
        %v1406 = vsel %vm1187, %v1390, %v1405
        %v1407 = vrot.slane %v1394, 4
        %v1408 = vsel %vm1187, %v1407, %v1370
        %v1409 = vrot.slane %v1370, 4
        %v1410 = vsel %vm1187, %v1394, %v1409
        %1411 = vst [vmem:[#allocation2] sm:$0xff] %v1284
        %1412 = vst [vmem:[#allocation2 + $0x8] sm:$0xff] %v1396
        %1413 = vst [vmem:[#allocation2 + $0x10] sm:$0xff] %v1286
        %1414 = vst [vmem:[#allocation2 + $0x18] sm:$0xff] %v1398
        %1415 = vst [vmem:[#allocation2 + $0x20] sm:$0xff] %v1288
        %1416 = vst [vmem:[#allocation2 + $0x28] sm:$0xff] %v1400
        %1417 = vst [vmem:[#allocation2 + $0x30] sm:$0xff] %v1290
        %1418 = vst [vmem:[#allocation2 + $0x38] sm:$0xff] %v1402
        %1419 = vst [vmem:[#allocation2 + $0x40] sm:$0xff] %v1292
        %1420 = vst [vmem:[#allocation2 + $0x48] sm:$0xff] %v1404
        %1421 = vst [vmem:[#allocation2 + $0x50] sm:$0xff] %v1294
        %1422 = vst [vmem:[#allocation2 + $0x58] sm:$0xff] %v1406
        %1423 = vst [vmem:[#allocation2 + $0x60] sm:$0xff] %v1296
        %1424 = vst [vmem:[#allocation2 + $0x68] sm:$0xff] %v1408
        %1425 = vst [vmem:[#allocation2 + $0x70] sm:$0xff] %v1298
        %1426 = vst [vmem:[#allocation2 + $0x78] sm:$0xff] %v1410
        %v1427 = vld [vmem:[#allocation7] sm:$0xf]
        %v1428 = vld [vmem:[#allocation7 + $0x4] sm:$0xf]
        %v1429 = vld [vmem:[#allocation7 + $0x8] sm:$0xf]
        %v1430 = vld [vmem:[#allocation7 + $0xc] sm:$0xf]
        %v1431 = vld [vmem:[#allocation2] sm:$0xff]
        %v1432 = vld [vmem:[#allocation2 + $0x8] sm:$0xff]
        %v1437 = vunpack.c.l.b16 %v1427
        %v1438 = vunpack.c.l.b16 %v1428
        %v1439 = vunpack.c.l.b16 %v1429
        %v1440 = vunpack.c.l.b16 %v1430
        %v1441 = vpack.c.b16 %v1438, %v1437
        %v1442 = vpack.c.b16 %v1440, %v1439
        %v1446 = vsel %vm853, 0, 0
        %1448 = vmatpush.bf16.msra.mxu0 0
        %1449 = vmatpush.bf16.msra.mxu0 0
        %1450 = vmatpush.bf16.msra.mxu0 0
        %1451 = vmatpush.bf16.msra.mxu0 0
        %1452 = vmatpush.bf16.msra.mxu0 0
        %1453 = vmatpush.bf16.msra.mxu0 0
        %1454 = vmatpush.bf16.msra.mxu0 %v1442
        %1455 = vmatpush.bf16.msra.mxu0 %v1441
        %1456 = vmatmul.bf16.gmra.mxu0 %v1446
        %v1457 = vpop.f32.mrf.mxu0
        %v1458 = vadd.f32 0.0, %v1457
        %v1459 = vpop.f32.mrf.mxu0
        %v1460 = vadd.f32 0.0, %v1459
        %1461 = vdwg.mxu0
        %v1462 = vadd.f32 %v1431, %v1458
        %v1463 = vadd.f32 %v1432, %v1460
        %v1464 = vxor.u32 %v1462, 2147483648
        %v1465 = vxor.u32 %v1463, 2147483648
        %v1466 = vmul.f32 %v1464, 1.442695
        %v1467 = vpow.pop %v1466
        %v1468 = vmul.f32 %v1465, 1.442695
        %v1469 = vpow.pop %v1468
        %v1470 = vadd.f32 %v1467, 1.0
        %v1471 = vadd.f32 %v1469, 1.0
        %v1472 = vrcp.pop %v1470
        %v1473 = vmul.f32 %v1470, %v1472
        %v1474 = vsub.f32 1.0, %v1473
        %v1475 = vmul.f32 %v1472, %v1474
        %v1476 = vadd.f32 %v1472, %v1475
        %vm1477 = vweird.f32 %v1470
        %vm1478 = vweird.f32 %v1472
        %vm1479 = vmor %vm1477, %vm1478
        %v1480 = vsel %vm1479, %v1472, %v1476
        %v1481 = vand.u32 2147483647, %v1470
        %vm1482 = vcmp.eq.f32.partialorder %v1481, 8.507059e+37
        %v1483 = vand.u32 %v1470, 2147483648
        %v1484 = vor.u32 1.1754944e-38, %v1483
        %v1485 = vsel %vm1482, %v1484, %v1480
        %v1486 = vmul.f32 1.0, %v1485
        %v1487 = vrcp.pop %v1471
        %v1488 = vmul.f32 %v1471, %v1487
        %v1489 = vsub.f32 1.0, %v1488
        %v1490 = vmul.f32 %v1487, %v1489
        %v1491 = vadd.f32 %v1487, %v1490
        %vm1492 = vweird.f32 %v1471
        %vm1493 = vweird.f32 %v1487
        %vm1494 = vmor %vm1492, %vm1493
        %v1495 = vsel %vm1494, %v1487, %v1491
        %v1496 = vand.u32 2147483647, %v1471
        %vm1497 = vcmp.eq.f32.partialorder %v1496, 8.507059e+37
        %v1498 = vand.u32 %v1471, 2147483648
        %v1499 = vor.u32 1.1754944e-38, %v1498
        %v1500 = vsel %vm1497, %v1499, %v1495
        %v1501 = vmul.f32 1.0, %v1500
        %v1502 = vtanh.pop %v1462
        %v1503 = vtanh.pop %v1463
        %v1504 = vmul.f32 %v1486, 0.0
        %v1505 = vmul.f32 %v1501, 0.0
        %1508 = vrot.lane.b32.xlu0 %v1502, 32
        %v1509 = vpop.permute.xlu0 %1508
        %1510 = vrot.lane.b32.xlu0 %v1503, 32
        %v1511 = vpop.permute.xlu0 %1510
        %v1514 = vmul.f32 %v1486, %v1509
        %v1515 = vmul.f32 %v1501, %v1511
        %1518 = vrot.lane.b32.xlu0 %v1514, 32
        %v1519 = vpop.permute.xlu0 %1518
        %1520 = vrot.lane.b32.xlu0 %v1515, 32
        %v1521 = vpop.permute.xlu0 %1520
        %v1524 = vadd.f32 %v1504, %v1519
        %v1525 = vadd.f32 %v1505, %v1521
        %v1526 = vtanh.pop %v1524
        %v1527 = vtanh.pop %v1525
        %1530 = vrot.lane.b32.xlu0 %v1526, 32
        %v1531 = vpop.permute.xlu0 %1530
        %1532 = vrot.lane.b32.xlu0 %v1527, 32
        %v1533 = vpop.permute.xlu0 %1532
        %v1536 = vmul.f32 %v1486, %v1531
        %v1537 = vmul.f32 %v1501, %v1533
        %s1538 = scalar_lea.vmem [#allocation2], 16
        %v1539 = vld [vmem:[%s1538] sm:$0xff]
        %v1540 = vld [vmem:[%s1538 + $0x8] sm:$0xff]
        %v1541 = vpack.c.bf16 %v1537, %v1536
        %1543 = vrot.lane.b32.xlu0 %v1541, 64
        %v1544 = vpop.permute.xlu0 %1543
        %v1546 = vsel %vm853, %v1544, 0
        %1548 = vmatpush.bf16.msra.mxu0 0
        %1549 = vmatpush.bf16.msra.mxu0 0
        %1550 = vmatpush.bf16.msra.mxu0 0
        %1551 = vmatpush.bf16.msra.mxu0 0
        %1552 = vmatpush.bf16.msra.mxu0 0
        %1553 = vmatpush.bf16.msra.mxu0 0
        %1554 = vmatpush.bf16.msra.mxu0 %v1442
        %1555 = vmatpush.bf16.msra.mxu0 %v1441
        %1556 = vmatmul.bf16.gmra.mxu0 %v1546
        %v1557 = vpop.f32.mrf.mxu0
        %v1558 = vadd.f32 0.0, %v1557
        %v1559 = vpop.f32.mrf.mxu0
        %v1560 = vadd.f32 0.0, %v1559
        %1561 = vdwg.mxu0
        %v1562 = vadd.f32 %v1539, %v1558
        %v1563 = vadd.f32 %v1540, %v1560
        %v1564 = vxor.u32 %v1562, 2147483648
        %v1565 = vxor.u32 %v1563, 2147483648
        %v1566 = vmul.f32 %v1564, 1.442695
        %v1567 = vpow.pop %v1566
        %v1568 = vmul.f32 %v1565, 1.442695
        %v1569 = vpow.pop %v1568
        %v1570 = vadd.f32 %v1567, 1.0
        %v1571 = vadd.f32 %v1569, 1.0
        %v1572 = vrcp.pop %v1570
        %v1573 = vmul.f32 %v1570, %v1572
        %v1574 = vsub.f32 1.0, %v1573
        %v1575 = vmul.f32 %v1572, %v1574
        %v1576 = vadd.f32 %v1572, %v1575
        %vm1577 = vweird.f32 %v1570
        %vm1578 = vweird.f32 %v1572
        %vm1579 = vmor %vm1577, %vm1578
        %v1580 = vsel %vm1579, %v1572, %v1576
        %v1581 = vand.u32 2147483647, %v1570
        %vm1582 = vcmp.eq.f32.partialorder %v1581, 8.507059e+37
        %v1583 = vand.u32 %v1570, 2147483648
        %v1584 = vor.u32 1.1754944e-38, %v1583
        %v1585 = vsel %vm1582, %v1584, %v1580
        %v1586 = vmul.f32 1.0, %v1585
        %v1587 = vrcp.pop %v1571
        %v1588 = vmul.f32 %v1571, %v1587
        %v1589 = vsub.f32 1.0, %v1588
        %v1590 = vmul.f32 %v1587, %v1589
        %v1591 = vadd.f32 %v1587, %v1590
        %vm1592 = vweird.f32 %v1571
        %vm1593 = vweird.f32 %v1587
        %vm1594 = vmor %vm1592, %vm1593
        %v1595 = vsel %vm1594, %v1587, %v1591
        %v1596 = vand.u32 2147483647, %v1571
        %vm1597 = vcmp.eq.f32.partialorder %v1596, 8.507059e+37
        %v1598 = vand.u32 %v1571, 2147483648
        %v1599 = vor.u32 1.1754944e-38, %v1598
        %v1600 = vsel %vm1597, %v1599, %v1595
        %v1601 = vmul.f32 1.0, %v1600
        %v1602 = vtanh.pop %v1562
        %v1603 = vtanh.pop %v1563
        %v1604 = vmul.f32 %v1586, %v1524
        %v1605 = vmul.f32 %v1601, %v1525
        %1608 = vrot.lane.b32.xlu0 %v1602, 32
        %v1609 = vpop.permute.xlu0 %1608
        %1610 = vrot.lane.b32.xlu0 %v1603, 32
        %v1611 = vpop.permute.xlu0 %1610
        %v1614 = vmul.f32 %v1586, %v1609
        %v1615 = vmul.f32 %v1601, %v1611
        %1618 = vrot.lane.b32.xlu0 %v1614, 32
        %v1619 = vpop.permute.xlu0 %1618
        %1620 = vrot.lane.b32.xlu0 %v1615, 32
        %v1621 = vpop.permute.xlu0 %1620
        %v1624 = vadd.f32 %v1604, %v1619
        %v1625 = vadd.f32 %v1605, %v1621
        %v1626 = vtanh.pop %v1624
        %v1627 = vtanh.pop %v1625
        %1630 = vrot.lane.b32.xlu0 %v1626, 32
        %v1631 = vpop.permute.xlu0 %1630
        %1632 = vrot.lane.b32.xlu0 %v1627, 32
        %v1633 = vpop.permute.xlu0 %1632
        %v1636 = vmul.f32 %v1586, %v1631
        %v1637 = vmul.f32 %v1601, %v1633
        %s1638 = scalar_lea.vmem [#allocation2], 32
        %v1639 = vld [vmem:[%s1638] sm:$0xff]
        %v1640 = vld [vmem:[%s1638 + $0x8] sm:$0xff]
        %v1641 = vpack.c.bf16 %v1637, %v1636
        %1643 = vrot.lane.b32.xlu0 %v1641, 64
        %v1644 = vpop.permute.xlu0 %1643
        %v1646 = vsel %vm853, %v1644, 0
        %1648 = vmatpush.bf16.msra.mxu0 0
        %1649 = vmatpush.bf16.msra.mxu0 0
        %1650 = vmatpush.bf16.msra.mxu0 0
        %1651 = vmatpush.bf16.msra.mxu0 0
        %1652 = vmatpush.bf16.msra.mxu0 0
        %1653 = vmatpush.bf16.msra.mxu0 0
        %1654 = vmatpush.bf16.msra.mxu0 %v1442
        %1655 = vmatpush.bf16.msra.mxu0 %v1441
        %1656 = vmatmul.bf16.gmra.mxu0 %v1646
        %v1657 = vpop.f32.mrf.mxu0
        %v1658 = vadd.f32 0.0, %v1657
        %v1659 = vpop.f32.mrf.mxu0
        %v1660 = vadd.f32 0.0, %v1659
        %1661 = vdwg.mxu0
        %v1662 = vadd.f32 %v1639, %v1658
        %v1663 = vadd.f32 %v1640, %v1660
        %v1664 = vxor.u32 %v1662, 2147483648
        %v1665 = vxor.u32 %v1663, 2147483648
        %v1666 = vmul.f32 %v1664, 1.442695
        %v1667 = vpow.pop %v1666
        %v1668 = vmul.f32 %v1665, 1.442695
        %v1669 = vpow.pop %v1668
        %v1670 = vadd.f32 %v1667, 1.0
        %v1671 = vadd.f32 %v1669, 1.0
        %v1672 = vrcp.pop %v1670
        %v1673 = vmul.f32 %v1670, %v1672
        %v1674 = vsub.f32 1.0, %v1673
        %v1675 = vmul.f32 %v1672, %v1674
        %v1676 = vadd.f32 %v1672, %v1675
        %vm1677 = vweird.f32 %v1670
        %vm1678 = vweird.f32 %v1672
        %vm1679 = vmor %vm1677, %vm1678
        %v1680 = vsel %vm1679, %v1672, %v1676
        %v1681 = vand.u32 2147483647, %v1670
        %vm1682 = vcmp.eq.f32.partialorder %v1681, 8.507059e+37
        %v1683 = vand.u32 %v1670, 2147483648
        %v1684 = vor.u32 1.1754944e-38, %v1683
        %v1685 = vsel %vm1682, %v1684, %v1680
        %v1686 = vmul.f32 1.0, %v1685
        %v1687 = vrcp.pop %v1671
        %v1688 = vmul.f32 %v1671, %v1687
        %v1689 = vsub.f32 1.0, %v1688
        %v1690 = vmul.f32 %v1687, %v1689
        %v1691 = vadd.f32 %v1687, %v1690
        %vm1692 = vweird.f32 %v1671
        %vm1693 = vweird.f32 %v1687
        %vm1694 = vmor %vm1692, %vm1693
        %v1695 = vsel %vm1694, %v1687, %v1691
        %v1696 = vand.u32 2147483647, %v1671
        %vm1697 = vcmp.eq.f32.partialorder %v1696, 8.507059e+37
        %v1698 = vand.u32 %v1671, 2147483648
        %v1699 = vor.u32 1.1754944e-38, %v1698
        %v1700 = vsel %vm1697, %v1699, %v1695
        %v1701 = vmul.f32 1.0, %v1700
        %v1702 = vtanh.pop %v1662
        %v1703 = vtanh.pop %v1663
        %v1704 = vmul.f32 %v1686, %v1624
        %v1705 = vmul.f32 %v1701, %v1625
        %1708 = vrot.lane.b32.xlu0 %v1702, 32
        %v1709 = vpop.permute.xlu0 %1708
        %1710 = vrot.lane.b32.xlu0 %v1703, 32
        %v1711 = vpop.permute.xlu0 %1710
        %v1714 = vmul.f32 %v1686, %v1709
        %v1715 = vmul.f32 %v1701, %v1711
        %1718 = vrot.lane.b32.xlu0 %v1714, 32
        %v1719 = vpop.permute.xlu0 %1718
        %1720 = vrot.lane.b32.xlu0 %v1715, 32
        %v1721 = vpop.permute.xlu0 %1720
        %v1724 = vadd.f32 %v1704, %v1719
        %v1725 = vadd.f32 %v1705, %v1721
        %v1726 = vtanh.pop %v1724
        %v1727 = vtanh.pop %v1725
        %1730 = vrot.lane.b32.xlu0 %v1726, 32
        %v1731 = vpop.permute.xlu0 %1730
        %1732 = vrot.lane.b32.xlu0 %v1727, 32
        %v1733 = vpop.permute.xlu0 %1732
        %v1736 = vmul.f32 %v1686, %v1731
        %v1737 = vmul.f32 %v1701, %v1733
        %s1738 = scalar_lea.vmem [#allocation2], 48
        %v1739 = vld [vmem:[%s1738] sm:$0xff]
        %v1740 = vld [vmem:[%s1738 + $0x8] sm:$0xff]
        %v1741 = vpack.c.bf16 %v1737, %v1736
        %1743 = vrot.lane.b32.xlu0 %v1741, 64
        %v1744 = vpop.permute.xlu0 %1743
        %v1746 = vsel %vm853, %v1744, 0
        %1748 = vmatpush.bf16.msra.mxu0 0
        %1749 = vmatpush.bf16.msra.mxu0 0
        %1750 = vmatpush.bf16.msra.mxu0 0
        %1751 = vmatpush.bf16.msra.mxu0 0
        %1752 = vmatpush.bf16.msra.mxu0 0
        %1753 = vmatpush.bf16.msra.mxu0 0
        %1754 = vmatpush.bf16.msra.mxu0 %v1442
        %1755 = vmatpush.bf16.msra.mxu0 %v1441
        %1756 = vmatmul.bf16.gmra.mxu0 %v1746
        %v1757 = vpop.f32.mrf.mxu0
        %v1758 = vadd.f32 0.0, %v1757
        %v1759 = vpop.f32.mrf.mxu0
        %v1760 = vadd.f32 0.0, %v1759
        %1761 = vdwg.mxu0
        %v1762 = vadd.f32 %v1739, %v1758
        %v1763 = vadd.f32 %v1740, %v1760
        %v1764 = vxor.u32 %v1762, 2147483648
        %v1765 = vxor.u32 %v1763, 2147483648
        %v1766 = vmul.f32 %v1764, 1.442695
        %v1767 = vpow.pop %v1766
        %v1768 = vmul.f32 %v1765, 1.442695
        %v1769 = vpow.pop %v1768
        %v1770 = vadd.f32 %v1767, 1.0
        %v1771 = vadd.f32 %v1769, 1.0
        %v1772 = vrcp.pop %v1770
        %v1773 = vmul.f32 %v1770, %v1772
        %v1774 = vsub.f32 1.0, %v1773
        %v1775 = vmul.f32 %v1772, %v1774
        %v1776 = vadd.f32 %v1772, %v1775
        %vm1777 = vweird.f32 %v1770
        %vm1778 = vweird.f32 %v1772
        %vm1779 = vmor %vm1777, %vm1778
        %v1780 = vsel %vm1779, %v1772, %v1776
        %v1781 = vand.u32 2147483647, %v1770
        %vm1782 = vcmp.eq.f32.partialorder %v1781, 8.507059e+37
        %v1783 = vand.u32 %v1770, 2147483648
        %v1784 = vor.u32 1.1754944e-38, %v1783
        %v1785 = vsel %vm1782, %v1784, %v1780
        %v1786 = vmul.f32 1.0, %v1785
        %v1787 = vrcp.pop %v1771
        %v1788 = vmul.f32 %v1771, %v1787
        %v1789 = vsub.f32 1.0, %v1788
        %v1790 = vmul.f32 %v1787, %v1789
        %v1791 = vadd.f32 %v1787, %v1790
        %vm1792 = vweird.f32 %v1771
        %vm1793 = vweird.f32 %v1787
        %vm1794 = vmor %vm1792, %vm1793
        %v1795 = vsel %vm1794, %v1787, %v1791
        %v1796 = vand.u32 2147483647, %v1771
        %vm1797 = vcmp.eq.f32.partialorder %v1796, 8.507059e+37
        %v1798 = vand.u32 %v1771, 2147483648
        %v1799 = vor.u32 1.1754944e-38, %v1798
        %v1800 = vsel %vm1797, %v1799, %v1795
        %v1801 = vmul.f32 1.0, %v1800
        %v1802 = vtanh.pop %v1762
        %v1803 = vtanh.pop %v1763
        %v1804 = vmul.f32 %v1786, %v1724
        %v1805 = vmul.f32 %v1801, %v1725
        %1808 = vrot.lane.b32.xlu0 %v1802, 32
        %v1809 = vpop.permute.xlu0 %1808
        %1810 = vrot.lane.b32.xlu0 %v1803, 32
        %v1811 = vpop.permute.xlu0 %1810
        %v1814 = vmul.f32 %v1786, %v1809
        %v1815 = vmul.f32 %v1801, %v1811
        %1818 = vrot.lane.b32.xlu0 %v1814, 32
        %v1819 = vpop.permute.xlu0 %1818
        %1820 = vrot.lane.b32.xlu0 %v1815, 32
        %v1821 = vpop.permute.xlu0 %1820
        %v1824 = vadd.f32 %v1804, %v1819
        %v1825 = vadd.f32 %v1805, %v1821
        %v1826 = vtanh.pop %v1824
        %v1827 = vtanh.pop %v1825
        %1830 = vrot.lane.b32.xlu0 %v1826, 32
        %v1831 = vpop.permute.xlu0 %1830
        %1832 = vrot.lane.b32.xlu0 %v1827, 32
        %v1833 = vpop.permute.xlu0 %1832
        %v1836 = vmul.f32 %v1786, %v1831
        %v1837 = vmul.f32 %v1801, %v1833
        %s1838 = scalar_lea.vmem [#allocation2], 64
        %v1839 = vld [vmem:[%s1838] sm:$0xff]
        %v1840 = vld [vmem:[%s1838 + $0x8] sm:$0xff]
        %v1841 = vpack.c.bf16 %v1837, %v1836
        %1843 = vrot.lane.b32.xlu0 %v1841, 64
        %v1844 = vpop.permute.xlu0 %1843
        %v1846 = vsel %vm853, %v1844, 0
        %1848 = vmatpush.bf16.msra.mxu0 0
        %1849 = vmatpush.bf16.msra.mxu0 0
        %1850 = vmatpush.bf16.msra.mxu0 0
        %1851 = vmatpush.bf16.msra.mxu0 0
        %1852 = vmatpush.bf16.msra.mxu0 0
        %1853 = vmatpush.bf16.msra.mxu0 0
        %1854 = vmatpush.bf16.msra.mxu0 %v1442
        %1855 = vmatpush.bf16.msra.mxu0 %v1441
        %1856 = vmatmul.bf16.gmra.mxu0 %v1846
        %v1857 = vpop.f32.mrf.mxu0
        %v1858 = vadd.f32 0.0, %v1857
        %v1859 = vpop.f32.mrf.mxu0
        %v1860 = vadd.f32 0.0, %v1859
        %1861 = vdwg.mxu0
        %v1862 = vadd.f32 %v1839, %v1858
        %v1863 = vadd.f32 %v1840, %v1860
        %v1864 = vxor.u32 %v1862, 2147483648
        %v1865 = vxor.u32 %v1863, 2147483648
        %v1866 = vmul.f32 %v1864, 1.442695
        %v1867 = vpow.pop %v1866
        %v1868 = vmul.f32 %v1865, 1.442695
        %v1869 = vpow.pop %v1868
        %v1870 = vadd.f32 %v1867, 1.0
        %v1871 = vadd.f32 %v1869, 1.0
        %v1872 = vrcp.pop %v1870
        %v1873 = vmul.f32 %v1870, %v1872
        %v1874 = vsub.f32 1.0, %v1873
        %v1875 = vmul.f32 %v1872, %v1874
        %v1876 = vadd.f32 %v1872, %v1875
        %vm1877 = vweird.f32 %v1870
        %vm1878 = vweird.f32 %v1872
        %vm1879 = vmor %vm1877, %vm1878
        %v1880 = vsel %vm1879, %v1872, %v1876
        %v1881 = vand.u32 2147483647, %v1870
        %vm1882 = vcmp.eq.f32.partialorder %v1881, 8.507059e+37
        %v1883 = vand.u32 %v1870, 2147483648
        %v1884 = vor.u32 1.1754944e-38, %v1883
        %v1885 = vsel %vm1882, %v1884, %v1880
        %v1886 = vmul.f32 1.0, %v1885
        %v1887 = vrcp.pop %v1871
        %v1888 = vmul.f32 %v1871, %v1887
        %v1889 = vsub.f32 1.0, %v1888
        %v1890 = vmul.f32 %v1887, %v1889
        %v1891 = vadd.f32 %v1887, %v1890
        %vm1892 = vweird.f32 %v1871
        %vm1893 = vweird.f32 %v1887
        %vm1894 = vmor %vm1892, %vm1893
        %v1895 = vsel %vm1894, %v1887, %v1891
        %v1896 = vand.u32 2147483647, %v1871
        %vm1897 = vcmp.eq.f32.partialorder %v1896, 8.507059e+37
        %v1898 = vand.u32 %v1871, 2147483648
        %v1899 = vor.u32 1.1754944e-38, %v1898
        %v1900 = vsel %vm1897, %v1899, %v1895
        %v1901 = vmul.f32 1.0, %v1900
        %v1902 = vtanh.pop %v1862
        %v1903 = vtanh.pop %v1863
        %v1904 = vmul.f32 %v1886, %v1824
        %v1905 = vmul.f32 %v1901, %v1825
        %1908 = vrot.lane.b32.xlu0 %v1902, 32
        %v1909 = vpop.permute.xlu0 %1908
        %1910 = vrot.lane.b32.xlu0 %v1903, 32
        %v1911 = vpop.permute.xlu0 %1910
        %v1914 = vmul.f32 %v1886, %v1909
        %v1915 = vmul.f32 %v1901, %v1911
        %1918 = vrot.lane.b32.xlu0 %v1914, 32
        %v1919 = vpop.permute.xlu0 %1918
        %1920 = vrot.lane.b32.xlu0 %v1915, 32
        %v1921 = vpop.permute.xlu0 %1920
        %v1924 = vadd.f32 %v1904, %v1919
        %v1925 = vadd.f32 %v1905, %v1921
        %v1926 = vtanh.pop %v1924
        %v1927 = vtanh.pop %v1925
        %1930 = vrot.lane.b32.xlu0 %v1926, 32
        %v1931 = vpop.permute.xlu0 %1930
        %1932 = vrot.lane.b32.xlu0 %v1927, 32
        %v1933 = vpop.permute.xlu0 %1932
        %v1936 = vmul.f32 %v1886, %v1931
        %v1937 = vmul.f32 %v1901, %v1933
        %s1938 = scalar_lea.vmem [#allocation2], 80
        %v1939 = vld [vmem:[%s1938] sm:$0xff]
        %v1940 = vld [vmem:[%s1938 + $0x8] sm:$0xff]
        %v1941 = vpack.c.bf16 %v1937, %v1936
        %1943 = vrot.lane.b32.xlu0 %v1941, 64
        %v1944 = vpop.permute.xlu0 %1943
        %v1946 = vsel %vm853, %v1944, 0
        %1948 = vmatpush.bf16.msra.mxu0 0
        %1949 = vmatpush.bf16.msra.mxu0 0
        %1950 = vmatpush.bf16.msra.mxu0 0
        %1951 = vmatpush.bf16.msra.mxu0 0
        %1952 = vmatpush.bf16.msra.mxu0 0
        %1953 = vmatpush.bf16.msra.mxu0 0
        %1954 = vmatpush.bf16.msra.mxu0 %v1442
        %1955 = vmatpush.bf16.msra.mxu0 %v1441
        %1956 = vmatmul.bf16.gmra.mxu0 %v1946
        %v1957 = vpop.f32.mrf.mxu0
        %v1958 = vadd.f32 0.0, %v1957
        %v1959 = vpop.f32.mrf.mxu0
        %v1960 = vadd.f32 0.0, %v1959
        %1961 = vdwg.mxu0
        %v1962 = vadd.f32 %v1939, %v1958
        %v1963 = vadd.f32 %v1940, %v1960
        %v1964 = vxor.u32 %v1962, 2147483648
        %v1965 = vxor.u32 %v1963, 2147483648
        %v1966 = vmul.f32 %v1964, 1.442695
        %v1967 = vpow.pop %v1966
        %v1968 = vmul.f32 %v1965, 1.442695
        %v1969 = vpow.pop %v1968
        %v1970 = vadd.f32 %v1967, 1.0
        %v1971 = vadd.f32 %v1969, 1.0
        %v1972 = vrcp.pop %v1970
        %v1973 = vmul.f32 %v1970, %v1972
        %v1974 = vsub.f32 1.0, %v1973
        %v1975 = vmul.f32 %v1972, %v1974
        %v1976 = vadd.f32 %v1972, %v1975
        %vm1977 = vweird.f32 %v1970
        %vm1978 = vweird.f32 %v1972
        %vm1979 = vmor %vm1977, %vm1978
        %v1980 = vsel %vm1979, %v1972, %v1976
        %v1981 = vand.u32 2147483647, %v1970
        %vm1982 = vcmp.eq.f32.partialorder %v1981, 8.507059e+37
        %v1983 = vand.u32 %v1970, 2147483648
        %v1984 = vor.u32 1.1754944e-38, %v1983
        %v1985 = vsel %vm1982, %v1984, %v1980
        %v1986 = vmul.f32 1.0, %v1985
        %v1987 = vrcp.pop %v1971
        %v1988 = vmul.f32 %v1971, %v1987
        %v1989 = vsub.f32 1.0, %v1988
        %v1990 = vmul.f32 %v1987, %v1989
        %v1991 = vadd.f32 %v1987, %v1990
        %vm1992 = vweird.f32 %v1971
        %vm1993 = vweird.f32 %v1987
        %vm1994 = vmor %vm1992, %vm1993
        %v1995 = vsel %vm1994, %v1987, %v1991
        %v1996 = vand.u32 2147483647, %v1971
        %vm1997 = vcmp.eq.f32.partialorder %v1996, 8.507059e+37
        %v1998 = vand.u32 %v1971, 2147483648
        %v1999 = vor.u32 1.1754944e-38, %v1998
        %v2000 = vsel %vm1997, %v1999, %v1995
        %v2001 = vmul.f32 1.0, %v2000
        %v2002 = vtanh.pop %v1962
        %v2003 = vtanh.pop %v1963
        %v2004 = vmul.f32 %v1986, %v1924
        %v2005 = vmul.f32 %v2001, %v1925
        %2008 = vrot.lane.b32.xlu0 %v2002, 32
        %v2009 = vpop.permute.xlu0 %2008
        %2010 = vrot.lane.b32.xlu0 %v2003, 32
        %v2011 = vpop.permute.xlu0 %2010
        %v2014 = vmul.f32 %v1986, %v2009
        %v2015 = vmul.f32 %v2001, %v2011
        %2018 = vrot.lane.b32.xlu0 %v2014, 32
        %v2019 = vpop.permute.xlu0 %2018
        %2020 = vrot.lane.b32.xlu0 %v2015, 32
        %v2021 = vpop.permute.xlu0 %2020
        %v2024 = vadd.f32 %v2004, %v2019
        %v2025 = vadd.f32 %v2005, %v2021
        %v2026 = vtanh.pop %v2024
        %v2027 = vtanh.pop %v2025
        %2030 = vrot.lane.b32.xlu0 %v2026, 32
        %v2031 = vpop.permute.xlu0 %2030
        %2032 = vrot.lane.b32.xlu0 %v2027, 32
        %v2033 = vpop.permute.xlu0 %2032
        %v2036 = vmul.f32 %v1986, %v2031
        %v2037 = vmul.f32 %v2001, %v2033
        %s2038 = scalar_lea.vmem [#allocation2], 96
        %v2039 = vld [vmem:[%s2038] sm:$0xff]
        %v2040 = vld [vmem:[%s2038 + $0x8] sm:$0xff]
        %v2041 = vpack.c.bf16 %v2037, %v2036
        %2043 = vrot.lane.b32.xlu0 %v2041, 64
        %v2044 = vpop.permute.xlu0 %2043
        %v2046 = vsel %vm853, %v2044, 0
        %2048 = vmatpush.bf16.msra.mxu0 0
        %2049 = vmatpush.bf16.msra.mxu0 0
        %2050 = vmatpush.bf16.msra.mxu0 0
        %2051 = vmatpush.bf16.msra.mxu0 0
        %2052 = vmatpush.bf16.msra.mxu0 0
        %2053 = vmatpush.bf16.msra.mxu0 0
        %2054 = vmatpush.bf16.msra.mxu0 %v1442
        %2055 = vmatpush.bf16.msra.mxu0 %v1441
        %2056 = vmatmul.bf16.gmra.mxu0 %v2046
        %v2057 = vpop.f32.mrf.mxu0
        %v2058 = vadd.f32 0.0, %v2057
        %v2059 = vpop.f32.mrf.mxu0
        %v2060 = vadd.f32 0.0, %v2059
        %2061 = vdwg.mxu0
        %v2062 = vadd.f32 %v2039, %v2058
        %v2063 = vadd.f32 %v2040, %v2060
        %v2064 = vxor.u32 %v2062, 2147483648
        %v2065 = vxor.u32 %v2063, 2147483648
        %v2066 = vmul.f32 %v2064, 1.442695
        %v2067 = vpow.pop %v2066
        %v2068 = vmul.f32 %v2065, 1.442695
        %v2069 = vpow.pop %v2068
        %v2070 = vadd.f32 %v2067, 1.0
        %v2071 = vadd.f32 %v2069, 1.0
        %v2072 = vrcp.pop %v2070
        %v2073 = vmul.f32 %v2070, %v2072
        %v2074 = vsub.f32 1.0, %v2073
        %v2075 = vmul.f32 %v2072, %v2074
        %v2076 = vadd.f32 %v2072, %v2075
        %vm2077 = vweird.f32 %v2070
        %vm2078 = vweird.f32 %v2072
        %vm2079 = vmor %vm2077, %vm2078
        %v2080 = vsel %vm2079, %v2072, %v2076
        %v2081 = vand.u32 2147483647, %v2070
        %vm2082 = vcmp.eq.f32.partialorder %v2081, 8.507059e+37
        %v2083 = vand.u32 %v2070, 2147483648
        %v2084 = vor.u32 1.1754944e-38, %v2083
        %v2085 = vsel %vm2082, %v2084, %v2080
        %v2086 = vmul.f32 1.0, %v2085
        %v2087 = vrcp.pop %v2071
        %v2088 = vmul.f32 %v2071, %v2087
        %v2089 = vsub.f32 1.0, %v2088
        %v2090 = vmul.f32 %v2087, %v2089
        %v2091 = vadd.f32 %v2087, %v2090
        %vm2092 = vweird.f32 %v2071
        %vm2093 = vweird.f32 %v2087
        %vm2094 = vmor %vm2092, %vm2093
        %v2095 = vsel %vm2094, %v2087, %v2091
        %v2096 = vand.u32 2147483647, %v2071
        %vm2097 = vcmp.eq.f32.partialorder %v2096, 8.507059e+37
        %v2098 = vand.u32 %v2071, 2147483648
        %v2099 = vor.u32 1.1754944e-38, %v2098
        %v2100 = vsel %vm2097, %v2099, %v2095
        %v2101 = vmul.f32 1.0, %v2100
        %v2102 = vtanh.pop %v2062
        %v2103 = vtanh.pop %v2063
        %v2104 = vmul.f32 %v2086, %v2024
        %v2105 = vmul.f32 %v2101, %v2025
        %2108 = vrot.lane.b32.xlu0 %v2102, 32
        %v2109 = vpop.permute.xlu0 %2108
        %2110 = vrot.lane.b32.xlu0 %v2103, 32
        %v2111 = vpop.permute.xlu0 %2110
        %v2114 = vmul.f32 %v2086, %v2109
        %v2115 = vmul.f32 %v2101, %v2111
        %2118 = vrot.lane.b32.xlu0 %v2114, 32
        %v2119 = vpop.permute.xlu0 %2118
        %2120 = vrot.lane.b32.xlu0 %v2115, 32
        %v2121 = vpop.permute.xlu0 %2120
        %v2124 = vadd.f32 %v2104, %v2119
        %v2125 = vadd.f32 %v2105, %v2121
        %v2126 = vtanh.pop %v2124
        %v2127 = vtanh.pop %v2125
        %2130 = vrot.lane.b32.xlu0 %v2126, 32
        %v2131 = vpop.permute.xlu0 %2130
        %2132 = vrot.lane.b32.xlu0 %v2127, 32
        %v2133 = vpop.permute.xlu0 %2132
        %v2136 = vmul.f32 %v2086, %v2131
        %v2137 = vmul.f32 %v2101, %v2133
        %s2138 = scalar_lea.vmem [#allocation2], 112
        %v2139 = vld [vmem:[%s2138] sm:$0xff]
        %v2140 = vld [vmem:[%s2138 + $0x8] sm:$0xff]
        %v2141 = vpack.c.bf16 %v2137, %v2136
        %2143 = vrot.lane.b32.xlu0 %v2141, 64
        %v2144 = vpop.permute.xlu0 %2143
        %v2146 = vsel %vm853, %v2144, 0
        %2148 = vmatpush.bf16.msra.mxu0 0
        %2149 = vmatpush.bf16.msra.mxu0 0
        %2150 = vmatpush.bf16.msra.mxu0 0
        %2151 = vmatpush.bf16.msra.mxu0 0
        %2152 = vmatpush.bf16.msra.mxu0 0
        %2153 = vmatpush.bf16.msra.mxu0 0
        %2154 = vmatpush.bf16.msra.mxu0 %v1442
        %2155 = vmatpush.bf16.msra.mxu0 %v1441
        %2156 = vmatmul.bf16.gmra.mxu0 %v2146
        %v2157 = vpop.f32.mrf.mxu0
        %v2158 = vadd.f32 0.0, %v2157
        %v2159 = vpop.f32.mrf.mxu0
        %v2160 = vadd.f32 0.0, %v2159
        %2161 = vdwg.mxu0
        %v2162 = vadd.f32 %v2139, %v2158
        %v2163 = vadd.f32 %v2140, %v2160
        %v2164 = vxor.u32 %v2162, 2147483648
        %v2165 = vxor.u32 %v2163, 2147483648
        %v2166 = vmul.f32 %v2164, 1.442695
        %v2167 = vpow.pop %v2166
        %v2168 = vmul.f32 %v2165, 1.442695
        %v2169 = vpow.pop %v2168
        %v2170 = vadd.f32 %v2167, 1.0
        %v2171 = vadd.f32 %v2169, 1.0
        %v2172 = vrcp.pop %v2170
        %v2173 = vmul.f32 %v2170, %v2172
        %v2174 = vsub.f32 1.0, %v2173
        %v2175 = vmul.f32 %v2172, %v2174
        %v2176 = vadd.f32 %v2172, %v2175
        %vm2177 = vweird.f32 %v2170
        %vm2178 = vweird.f32 %v2172
        %vm2179 = vmor %vm2177, %vm2178
        %v2180 = vsel %vm2179, %v2172, %v2176
        %v2181 = vand.u32 2147483647, %v2170
        %vm2182 = vcmp.eq.f32.partialorder %v2181, 8.507059e+37
        %v2183 = vand.u32 %v2170, 2147483648
        %v2184 = vor.u32 1.1754944e-38, %v2183
        %v2185 = vsel %vm2182, %v2184, %v2180
        %v2186 = vmul.f32 1.0, %v2185
        %v2187 = vrcp.pop %v2171
        %v2188 = vmul.f32 %v2171, %v2187
        %v2189 = vsub.f32 1.0, %v2188
        %v2190 = vmul.f32 %v2187, %v2189
        %v2191 = vadd.f32 %v2187, %v2190
        %vm2192 = vweird.f32 %v2171
        %vm2193 = vweird.f32 %v2187
        %vm2194 = vmor %vm2192, %vm2193
        %v2195 = vsel %vm2194, %v2187, %v2191
        %v2196 = vand.u32 2147483647, %v2171
        %vm2197 = vcmp.eq.f32.partialorder %v2196, 8.507059e+37
        %v2198 = vand.u32 %v2171, 2147483648
        %v2199 = vor.u32 1.1754944e-38, %v2198
        %v2200 = vsel %vm2197, %v2199, %v2195
        %v2201 = vmul.f32 1.0, %v2200
        %v2202 = vtanh.pop %v2162
        %v2203 = vtanh.pop %v2163
        %v2204 = vmul.f32 %v2186, %v2124
        %v2205 = vmul.f32 %v2201, %v2125
        %2208 = vrot.lane.b32.xlu0 %v2202, 32
        %v2209 = vpop.permute.xlu0 %2208
        %2210 = vrot.lane.b32.xlu0 %v2203, 32
        %v2211 = vpop.permute.xlu0 %2210
        %v2214 = vmul.f32 %v2186, %v2209
        %v2215 = vmul.f32 %v2201, %v2211
        %2218 = vrot.lane.b32.xlu0 %v2214, 32
        %v2219 = vpop.permute.xlu0 %2218
        %2220 = vrot.lane.b32.xlu0 %v2215, 32
        %v2221 = vpop.permute.xlu0 %2220
        %v2224 = vadd.f32 %v2204, %v2219
        %v2225 = vadd.f32 %v2205, %v2221
        %v2226 = vtanh.pop %v2224
        %v2227 = vtanh.pop %v2225
        %2230 = vrot.lane.b32.xlu0 %v2226, 32
        %v2231 = vpop.permute.xlu0 %2230
        %2232 = vrot.lane.b32.xlu0 %v2227, 32
        %v2233 = vpop.permute.xlu0 %2232
        %v2236 = vmul.f32 %v2186, %v2231
        %v2237 = vmul.f32 %v2201, %v2233
        %v2238 = vpack.c.bf16 %v2237, %v2236
        %v2239 = vld [vmem:[%s9] sm:$0xf]
        %v2240 = vld [vmem:[%s9 + $0x4] sm:$0xf]
        %v2241 = vld [vmem:[%s9 + $0x8] sm:$0xf]
        %v2242 = vld [vmem:[%s9 + $0xc] sm:$0xf]
        %v2243 = vld [vmem:[%s10] sm:$0x1]
        %v2245 = vperm.slane %v2243, 0
        %2248 = vrot.lane.b32.xlu0 %v2238, 64
        %v2249 = vpop.permute.xlu0 %2248
        %v2254 = vunpack.c.l.b16 %v2239
        %v2255 = vunpack.c.l.b16 %v2240
        %v2256 = vunpack.c.l.b16 %v2241
        %v2257 = vunpack.c.l.b16 %v2242
        %v2258 = vpack.c.b16 %v2255, %v2254
        %v2259 = vpack.c.b16 %v2257, %v2256
        %v2263 = vsel %vm853, %v2249, 0
        %2265 = vmatpush.bf16.msra.mxu0 0
        %2266 = vmatpush.bf16.msra.mxu0 0
        %2267 = vmatpush.bf16.msra.mxu0 0
        %2268 = vmatpush.bf16.msra.mxu0 0
        %2269 = vmatpush.bf16.msra.mxu0 0
        %2270 = vmatpush.bf16.msra.mxu0 0
        %2271 = vmatpush.bf16.msra.mxu0 %v2259
        %2272 = vmatpush.bf16.msra.mxu0 %v2258
        %2273 = vmatmul.bf16.gmra.mxu0 %v2263
        %v2274 = vpop.f32.mrf.mxu0
        %v2275 = vadd.f32 %v2245, %v2274
        %v2276 = vpop.f32.mrf.mxu0
        %v2277 = vadd.f32 %v2245, %v2276
        %2278 = vdwg.mxu0
        %2279 = vst.msk [vmem:[%s454] sm:$0xff] %vm529, %v2275
        %2280 = vst.msk [vmem:[%s454 + $0x8] sm:$0xff] %vm529, %v2277
        %p2281 = scmp.lt.s32.totalorder %s24, 1
        %s2282 = scalar_select %p2281, %s24, 1
        %s2283 = smul.addr %s2282, 2
        %s2284 = smul.addr %s2283, 8
        %s2285 = scalar_lea.vmem %s11, %s2284
        // Predicated region
        $region77: #{tpu_custom_call.1} parent=63 // pred_check
          %p2286 = pneg %p283
        $region78: #{tpu_custom_call.1} parent=63 // pred_check_branch
          %2288 = sbr.rel (%p2286) target = $region80
        $region79: #{tpu_custom_call.1} parent=63 // pred_region
          _
        $region80: #{tpu_custom_call.1} parent=63 // pred_fallthru
          _
      $region64: #{tpu_custom_call.1} parent=5 // pred_fallthru
        _
      %p2289 = scmp.le.s32.totalorder 2, %s19
      // Predicated region
      $region81: #{tpu_custom_call.1} parent=5 // pred_check
        %p2290 = pneg %p2289
      $region82: #{tpu_custom_call.1} parent=5 // pred_check_branch
        %2292 = sbr.rel (%p2290) target = $region84
      $region83: #{tpu_custom_call.1} parent=5 // pred_region
        %s2293 = ssub.s32 %s19, 2
        // Predicated region
        $region85: #{tpu_custom_call.1} parent=83 // pred_check
          %p2294 = pneg %p289
        $region86: #{tpu_custom_call.1} parent=83 // pred_check_branch
          %2296 = sbr.rel (%p2294) target = $region88
        $region87: #{tpu_custom_call.1} parent=83 // pred_region
          %p2297 = scmp.lt.s32.totalorder %s25, 1
          %s2298 = scalar_select %p2297, %s25, 1
          %s2299 = smul.addr %s2298, 2
          %s2300 = smul.addr %s2299, 8
          %s2301 = scalar_lea.vmem %s11, %s2300
        $region88: #{tpu_custom_call.1} parent=83 // pred_fallthru
          _
      $region84: #{tpu_custom_call.1} parent=5 // pred_fallthru
        _
    $region6: #{tpu_custom_call.1} parent=1 // loop_footer
      %s23 = sadd.s32 1, %s19
    $region7: #{tpu_custom_call.1} parent=1 // loop_footer_branch
      %18 = sbr.rel target = $region3
    $region8: #{tpu_custom_call.1} parent=1 // loop_exit
      _
    %2302 = vsyncpa [#allocation4], 1
    %s2303 = scalar_lea.sflag [#allocation4], 1
    %2304 = vsyncpa %s2303, 1
    %2305 = vsyncpa [#allocation6], 1

</llo_original>
